<compile_context>
chip_gen: v7x
topology: tpu7x:2x2x1
jax: 0.10.0
libtpu: 0.0.40
codegen_flags: <defaults>
</compile_context>

<pallas_src>
import functools

import jax
import jax.numpy as jnp
from jax.experimental import pallas as pl
from jax.experimental.pallas import tpu as pltpu

EPS = 1e-5


def _round_up(a, m):
    return -(-a // m) * m


def _vmem_budget_bytes():
    """Scoped-VMEM budget tiles are sized against (also requested explicitly)."""
    try:
        cap = int(pltpu.get_tpu_info().vmem_capacity_bytes)
    except Exception:
        cap = 64 << 20  # conservative fallback: v7x per-TensorCore VMEM
    # v5e/v6e: 128 MiB physical -> 48 MiB budget; v7x: 64 MiB physical -> 32 MiB.
    return (48 << 20) if cap >= (128 << 20) else (32 << 20)


def _layernorm_plain_kernel(x_ref, scale_ref, shift_ref, o_ref):
    """Plain LayerNorm: normalize the full last dim (width == emb_dim >= 128-ish)."""
    x = x_ref[...].astype(jnp.float32)
    scale = scale_ref[...].astype(jnp.float32)
    shift = shift_ref[...].astype(jnp.float32)
    mean = jnp.mean(x, axis=-1, keepdims=True)
    xc = x - mean
    var = jnp.mean(xc * xc, axis=-1, keepdims=True)
    # PyTorch module: scale * (x - mean) / (std + eps) + shift, unbiased=False.
    inv = pl.reciprocal(jnp.sqrt(var) + EPS, approx=False)
    o_ref[...] = (scale * (xc * inv) + shift).astype(o_ref.dtype)


def _layernorm_packed_kernel(x_ref, scale_ref, shift_ref, g_ref, gt_ref, o_ref, *,
                             group_size):
    """Lane-dense packed LayerNorm.

    Each (tile_rows, 128) tile holds 128 // group_size consecutive logical rows
    of `group_size` features; the segmented mean/var reduction and the
    broadcast-back are done with ones block-diagonal matmuls (G reduces,
    GT broadcasts) on the otherwise-idle MXU, so vregs are fully lane-utilized
    and stores are unmasked full-lane vst.
    """
    x = x_ref[...].astype(jnp.float32)
    scale = scale_ref[...].astype(jnp.float32)
    shift = shift_ref[...].astype(jnp.float32)
    G = g_ref[...]       # (width, n_groups), f32, precomputed in the wrapper
    GT = gt_ref[...]     # (n_groups, width)
    inv_gs = 1.0 / float(group_size)
    hi = jax.lax.Precision.HIGHEST  # exact f32 on the tiny reduce/broadcast dots

    mean_g = jnp.dot(x, G, preferred_element_type=jnp.float32, precision=hi) * inv_gs
    mean_b = jnp.dot(mean_g, GT, preferred_element_type=jnp.float32, precision=hi)
    xc = x - mean_b
    var_g = jnp.dot(xc * xc, G, preferred_element_type=jnp.float32, precision=hi) * inv_gs
    inv_g = pl.reciprocal(jnp.sqrt(var_g) + EPS, approx=False)
    inv_b = jnp.dot(inv_g, GT, preferred_element_type=jnp.float32, precision=hi)
    o_ref[...] = (scale * (xc * inv_b) + shift).astype(o_ref.dtype)


def layer_norm(x, scale, shift, *, max_tile_rows=None):
    """x: (..., emb_dim); scale, shift: (emb_dim,). Returns same shape/dtype as x."""
    orig_shape = x.shape
    emb_dim = orig_shape[-1]
    x2 = x.reshape(-1, emb_dim)
    n_rows = x2.shape[0]
    out_dtype = x.dtype

    # --- lane-dense packing for narrow feature dims (pad rows, never fall back) ---
    n_groups = 1
    width = emb_dim
    pad_rows = 0
    if emb_dim < 128 and 128 % emb_dim == 0:
        n_groups = 128 // emb_dim
        width = 128
        pad_rows = (-n_rows) % n_groups
        if pad_rows:
            x2 = jnp.concatenate(
                [x2, jnp.zeros((pad_rows, emb_dim), x2.dtype)], axis=0)
        x2 = x2.reshape((n_rows + pad_rows) // n_groups, width)  # contiguous reshape
    rows = x2.shape[0]

    scale_w = jnp.tile(scale.reshape(-1).astype(jnp.float32), n_groups).reshape(1, width)
    shift_w = jnp.tile(shift.reshape(-1).astype(jnp.float32), n_groups).reshape(1, width)

    # --- tile sizing: memory-bound -> big tiles, gated on per-generation VMEM ---
    itemsize = jnp.dtype(x.dtype).itemsize
    sub = {4: 8, 2: 16, 1: 32}.get(itemsize, 8)     # dtype-aware sublane multiple
    budget = _vmem_budget_bytes()
    # Per-step footprint ~= 2 in + 2 out tiles (x dtype, double-buffered)
    # + ~3 tile-sized f32 temporaries.  Size tiles to ~75% of the budget.
    bytes_per_row = width * (4 * itemsize + 3 * 4)
    tile_rows = int((budget * 3 // 4) // bytes_per_row)
    if max_tile_rows is not None:
        tile_rows = min(tile_rows, int(max_tile_rows))
    tile_rows = max(sub, (tile_rows // sub) * sub)

    if rows <= sub:
        tile_rows = rows                      # tiny input: one full-array block
    else:
        # Keep >= 2 grid steps so the row axis splits across TensorCores (v7x
        # megacore) and DMA/compute pipelining stays alive.
        tile_rows = min(tile_rows, _round_up(-(-rows // 2), sub))
        n_steps = -(-rows // tile_rows)
        if n_steps > 1 and n_steps % 2 == 1:  # prefer an even step count
            tile_rows = max(sub, _round_up(-(-rows // (n_steps + 1)), sub))
    grid = (pl.cdiv(rows, tile_rows),)        # ragged last block masked by Pallas

    # --- build the pallas_call ---
    if n_groups > 1:
        lane_grp = jnp.arange(width, dtype=jnp.int32) // emb_dim
        G = (lane_grp[:, None] == jnp.arange(n_groups, dtype=jnp.int32)[None, :]
             ).astype(jnp.float32)             # (width, n_groups) block-diag reduce
        GT = jnp.transpose(G)                  # (n_groups, width) broadcast-back
        kernel = functools.partial(_layernorm_packed_kernel, group_size=emb_dim)
        in_specs = [
            pl.BlockSpec((tile_rows, width), lambda i: (i, 0)),
            pl.BlockSpec((1, width), lambda i: (0, 0)),
            pl.BlockSpec((1, width), lambda i: (0, 0)),
            pl.BlockSpec((width, n_groups), lambda i: (0, 0)),
            pl.BlockSpec((n_groups, width), lambda i: (0, 0)),
        ]
        args = (x2, scale_w, shift_w, G, GT)
    else:
        kernel = _layernorm_plain_kernel
        in_specs = [
            pl.BlockSpec((tile_rows, width), lambda i: (i, 0)),
            pl.BlockSpec((1, width), lambda i: (0, 0)),
            pl.BlockSpec((1, width), lambda i: (0, 0)),
        ]
        args = (x2, scale_w, shift_w)

    out = pl.pallas_call(
        kernel,
        out_shape=jax.ShapeDtypeStruct((rows, width), out_dtype),
        grid_spec=pltpu.PrefetchScalarGridSpec(
            num_scalar_prefetch=0,
            grid=grid,
            in_specs=in_specs,
            out_specs=pl.BlockSpec((tile_rows, width), lambda i: (i, 0)),
        ),
        compiler_params=pltpu.CompilerParams(
            dimension_semantics=("parallel",),
            vmem_limit_bytes=budget,
        ),
    )(*args)

    if n_groups > 1:
        out = out.reshape(n_rows + pad_rows, emb_dim)
        if pad_rows:
            out = out[:n_rows]
    return out.reshape(orig_shape)


if __name__ == "__main__":
    # Module shapes: emb_dim = 32; input (batch=2, seq=8, emb_dim=32)
    emb_dim = 32
    key = jax.random.PRNGKey(0)
    x = jax.random.normal(key, (2, 8, emb_dim), dtype=jnp.float32)

    # nn.Parameter(torch.ones(emb_dim)) / torch.zeros(emb_dim)
    scale = jnp.ones((emb_dim,), dtype=jnp.float32)
    shift = jnp.zeros((emb_dim,), dtype=jnp.float32)

    def ref(xx, sc, sh):
        mean = jnp.mean(xx, axis=-1, keepdims=True)
        std = jnp.sqrt(jnp.mean((xx - mean) ** 2, axis=-1, keepdims=True))
        return sc * (xx - mean) / (std + EPS) + sh

    y = layer_norm(x, scale, shift)
    jax.block_until_ready(y)
    assert y.shape == x.shape and y.dtype == x.dtype
    assert jnp.allclose(y, ref(x, scale, shift), atol=1e-5, rtol=1e-5), "packed path mismatch"

    # Rows not divisible by 128 // emb_dim -> wrapper pads rows, still packed path.
    x_odd = jax.random.normal(jax.random.PRNGKey(1), (2, 7, emb_dim), dtype=jnp.float32)
    y_odd = layer_norm(x_odd, scale, shift)
    jax.block_until_ready(y_odd)
    assert jnp.allclose(y_odd, ref(x_odd, scale, shift), atol=1e-5, rtol=1e-5), "padded path mismatch"

    # Larger input -> multi-step even grid (pipelining + v7x megacore split).
    x_big = jax.random.normal(jax.random.PRNGKey(2), (4, 1024, emb_dim), dtype=jnp.float32)
    y_big = layer_norm(x_big, scale, shift)
    jax.block_until_ready(y_big)
    assert jnp.allclose(y_big, ref(x_big, scale, shift), atol=1e-5, rtol=1e-5), "multi-block mismatch"

    # Wide feature dim (>= 128 lanes) -> plain (unpacked) path.
    emb_wide = 256
    xw = jax.random.normal(jax.random.PRNGKey(3), (2, 16, emb_wide), dtype=jnp.float32)
    scw = jax.random.normal(jax.random.PRNGKey(4), (emb_wide,), dtype=jnp.float32)
    shw = jax.random.normal(jax.random.PRNGKey(5), (emb_wide,), dtype=jnp.float32)
    yw = layer_norm(xw, scw, shw)
    jax.block_until_ready(yw)
    assert jnp.allclose(yw, ref(xw, scw, shw), atol=1e-5, rtol=1e-5), "plain path mismatch"

    print("KERNEL_OK")
</pallas_src>

<mosaic_0001>
module attributes {stable_mosaic.version = 11 : i64} {
  func.func @_layernorm_packed_kernel(%arg0: i32, %arg1: memref<4x128xf32, #tpu.memory_space<vmem>>, %arg2: memref<1x128xf32, #tpu.memory_space<vmem>>, %arg3: memref<1x128xf32, #tpu.memory_space<vmem>>, %arg4: memref<128x4xf32, #tpu.memory_space<vmem>>, %arg5: memref<4x128xf32, #tpu.memory_space<vmem>>, %arg6: memref<4x128xf32, #tpu.memory_space<vmem>>) attributes {dimension_semantics = [#tpu.dimension_semantics<parallel>], iteration_bounds = array<i64: 1>, scalar_prefetch = 0 : i64, scratch_operands = 0 : i64, tpu.core_type = #tpu.core_type<tc>, window_params = [{transform_indices = @transform_0, window_bounds = array<i64: 4, 128>}, {pipeline_mode = #tpu.pipeline_mode<synchronous>, transform_indices = @transform_1, window_bounds = array<i64: 1, 128>}, {pipeline_mode = #tpu.pipeline_mode<synchronous>, transform_indices = @transform_2, window_bounds = array<i64: 1, 128>}, {pipeline_mode = #tpu.pipeline_mode<synchronous>, transform_indices = @transform_3, window_bounds = array<i64: 128, 4>}, {pipeline_mode = #tpu.pipeline_mode<synchronous>, transform_indices = @transform_4, window_bounds = array<i64: 4, 128>}, {transform_indices = @transform_5, window_bounds = array<i64: 4, 128>}]} {
    %c0 = arith.constant 0 : index
    %c0_0 = arith.constant 0 : index
    %0 = vector.load %arg1[%c0, %c0_0] : memref<4x128xf32, #tpu.memory_space<vmem>>, vector<4x128xf32>
    %c0_1 = arith.constant 0 : index
    %c0_2 = arith.constant 0 : index
    %1 = vector.load %arg2[%c0_1, %c0_2] : memref<1x128xf32, #tpu.memory_space<vmem>>, vector<1x128xf32>
    %c0_3 = arith.constant 0 : index
    %c0_4 = arith.constant 0 : index
    %2 = vector.load %arg3[%c0_3, %c0_4] : memref<1x128xf32, #tpu.memory_space<vmem>>, vector<1x128xf32>
    %c0_5 = arith.constant 0 : index
    %c0_6 = arith.constant 0 : index
    %3 = vector.load %arg4[%c0_5, %c0_6] : memref<128x4xf32, #tpu.memory_space<vmem>>, vector<128x4xf32>
    %c0_7 = arith.constant 0 : index
    %c0_8 = arith.constant 0 : index
    %4 = vector.load %arg5[%c0_7, %c0_8] : memref<4x128xf32, #tpu.memory_space<vmem>>, vector<4x128xf32>
    %cst = arith.constant dense<0.000000e+00> : vector<4x4xf32>
    %5 = tpu.matmul %0, %3, %cst {dimension_numbers = #tpu.dot_dimension_numbers<[1], [0], [0], [1], [0, 0, 1, 1], [], []>, precision = #tpu.contract_precision<fp32>} : vector<4x128xf32>, vector<128x4xf32>, vector<4x4xf32> -> vector<4x4xf32>
    %cst_9 = arith.constant 3.125000e-02 : f32
    %6 = vector.broadcast %cst_9 : f32 to vector<4x4xf32>
    %7 = arith.mulf %5, %6 : vector<4x4xf32>
    %cst_10 = arith.constant dense<0.000000e+00> : vector<4x128xf32>
    %8 = tpu.matmul %7, %4, %cst_10 {dimension_numbers = #tpu.dot_dimension_numbers<[1], [0], [0], [1], [0, 0, 1, 1], [], []>, precision = #tpu.contract_precision<fp32>} : vector<4x4xf32>, vector<4x128xf32>, vector<4x128xf32> -> vector<4x128xf32>
    %9 = arith.subf %0, %8 : vector<4x128xf32>
    %10 = arith.mulf %9, %9 : vector<4x128xf32>
    %cst_11 = arith.constant dense<0.000000e+00> : vector<4x4xf32>
    %11 = tpu.matmul %10, %3, %cst_11 {dimension_numbers = #tpu.dot_dimension_numbers<[1], [0], [0], [1], [0, 0, 1, 1], [], []>, precision = #tpu.contract_precision<fp32>} : vector<4x128xf32>, vector<128x4xf32>, vector<4x4xf32> -> vector<4x4xf32>
    %cst_12 = arith.constant 3.125000e-02 : f32
    %12 = vector.broadcast %cst_12 : f32 to vector<4x4xf32>
    %13 = arith.mulf %11, %12 : vector<4x4xf32>
    %14 = math.sqrt %13 : vector<4x4xf32>
    %cst_13 = arith.constant 9.99999974E-6 : f32
    %15 = vector.broadcast %cst_13 : f32 to vector<4x4xf32>
    %16 = arith.addf %14, %15 : vector<4x4xf32>
    %17 = tpu.reciprocal %16 : vector<4x4xf32> -> vector<4x4xf32>
    %cst_14 = arith.constant dense<0.000000e+00> : vector<4x128xf32>
    %18 = tpu.matmul %17, %4, %cst_14 {dimension_numbers = #tpu.dot_dimension_numbers<[1], [0], [0], [1], [0, 0, 1, 1], [], []>, precision = #tpu.contract_precision<fp32>} : vector<4x4xf32>, vector<4x128xf32>, vector<4x128xf32> -> vector<4x128xf32>
    %19 = arith.mulf %9, %18 : vector<4x128xf32>
    %20 = vector.broadcast %1 : vector<1x128xf32> to vector<4x128xf32>
    %21 = arith.mulf %20, %19 : vector<4x128xf32>
    %22 = vector.broadcast %2 : vector<1x128xf32> to vector<4x128xf32>
    %23 = arith.addf %21, %22 : vector<4x128xf32>
    %c0_15 = arith.constant 0 : index
    %c0_16 = arith.constant 0 : index
    %24 = vector.load %arg6[%c0_15, %c0_16] : memref<4x128xf32, #tpu.memory_space<vmem>>, vector<4x128xf32>
    tpu.vector_store %arg6[%c0_15, %c0_16], %23 {strides = array<i32>} : memref<4x128xf32, #tpu.memory_space<vmem>>, vector<4x128xf32>,
    return
  }
  func.func @transform_0(%arg0: i32) -> (i32, i32) {
    %c0_i32 = arith.constant 0 : i32
    %c0_i32_0 = arith.constant 0 : i32
    return %arg0, %c0_i32 : i32, i32
  }
  func.func @transform_1(%arg0: i32) -> (i32, i32) {
    %c0_i32 = arith.constant 0 : i32
    %c0_i32_0 = arith.constant 0 : i32
    %c0_i32_1 = arith.constant 0 : i32
    return %c0_i32, %c0_i32_0 : i32, i32
  }
  func.func @transform_2(%arg0: i32) -> (i32, i32) {
    %c0_i32 = arith.constant 0 : i32
    %c0_i32_0 = arith.constant 0 : i32
    %c0_i32_1 = arith.constant 0 : i32
    return %c0_i32, %c0_i32_0 : i32, i32
  }
  func.func @transform_3(%arg0: i32) -> (i32, i32) {
    %c0_i32 = arith.constant 0 : i32
    %c0_i32_0 = arith.constant 0 : i32
    %c0_i32_1 = arith.constant 0 : i32
    return %c0_i32, %c0_i32_0 : i32, i32
  }
  func.func @transform_4(%arg0: i32) -> (i32, i32) {
    %c0_i32 = arith.constant 0 : i32
    %c0_i32_0 = arith.constant 0 : i32
    %c0_i32_1 = arith.constant 0 : i32
    return %c0_i32, %c0_i32_0 : i32, i32
  }
  func.func @transform_5(%arg0: i32) -> (i32, i32) {
    %c0_i32 = arith.constant 0 : i32
    %c0_i32_0 = arith.constant 0 : i32
    return %arg0, %c0_i32 : i32, i32
  }
}

</mosaic_0001>

<llo_original>
// kernel: tpu_custom_call.1
$region0: #{tpu_custom_call.1}
  #allocation0 [shape = 'u32[]', space=smem, size = 0x4, offset = 0x4, fixed_abs, tag = 'smem constant byte address 0x4 - core index']
  #allocation1 [shape = 'u32[144,128]{1,0:T(1,128)}', space=vmem, size = 0x12000, scoped, tag = 'internal scratch']
  %s0 = inlined_call_operand.vmem [shape: f32[4,128], index: 0, kind: input, shape index: {}]
  %s1 = inlined_call_operand.vmem [shape: f32[1,128], index: 1, kind: input, shape index: {}]
  %s2 = inlined_call_operand.vmem [shape: f32[1,128], index: 2, kind: input, shape index: {}]
  %s3 = inlined_call_operand.vmem [shape: f32[128,4], index: 3, kind: input, shape index: {}]
  %s4 = inlined_call_operand.vmem [shape: f32[4,128], index: 4, kind: input, shape index: {}]
  %s5 = inlined_call_operand.hbm [shape: f32[4,128], index: 5, kind: output, shape index: {}]
  %s6 = sld [smem:[#allocation0]]
  $region30: #{tpu_custom_call.1} parent=0
    _
  %s8 = ssub.s32 1, %s6
  %s9 = scalar_select 0, %s8, %s6
  $region1: #{tpu_custom_call.1} parent=0
    #allocation2 [shape = 'u8[2048]{0}', space=vmem, size = 0x800, scoped, tag = 'output window, operand 0, single buffered']
    #allocation3 [shape = 's32[1]{0}', space=sflag, size = 0x4, scoped, tag = 'scoped memory for tpu_custom_call.1']
    %10 = vsyncpa [#allocation3], 0
    // Predicated region
    $region2: #{tpu_custom_call.1} parent=1 // pred_check
      _
    $region3: #{tpu_custom_call.1} parent=1 // pred_check_branch
      %12 = sbr.rel (0) target = $region5
    $region4: #{tpu_custom_call.1} parent=1 // pred_region
      _
    $region5: #{tpu_custom_call.1} parent=1 // pred_fallthru
      _
    // Predicated region
    $region6: #{tpu_custom_call.1} parent=1 // pred_check
      _
    $region7: #{tpu_custom_call.1} parent=1 // pred_check_branch
      %14 = sbr.rel (0) target = $region9
    $region8: #{tpu_custom_call.1} parent=1 // pred_region
      _
    $region9: #{tpu_custom_call.1} parent=1 // pred_fallthru
      _
    // Predicated region
    $region10: #{tpu_custom_call.1} parent=1 // pred_check
      _
    $region11: #{tpu_custom_call.1} parent=1 // pred_check_branch
      %16 = sbr.rel (0) target = $region13
    $region12: #{tpu_custom_call.1} parent=1 // pred_region
      _
    $region13: #{tpu_custom_call.1} parent=1 // pred_fallthru
      _
    // Predicated region
    $region14: #{tpu_custom_call.1} parent=1 // pred_check
      _
    $region15: #{tpu_custom_call.1} parent=1 // pred_check_branch
      %18 = sbr.rel (0) target = $region17
    $region16: #{tpu_custom_call.1} parent=1 // pred_region
      _
    $region17: #{tpu_custom_call.1} parent=1 // pred_fallthru
      _
    // Predicated region
    $region18: #{tpu_custom_call.1} parent=1 // pred_check
      _
    $region19: #{tpu_custom_call.1} parent=1 // pred_check_branch
      %20 = sbr.rel (0) target = $region21
    $region20: #{tpu_custom_call.1} parent=1 // pred_region
      _
    $region21: #{tpu_custom_call.1} parent=1 // pred_fallthru
      _
    %v21 = vld [vmem:[%s0] sm:$0xf]
    %v22 = vld [vmem:[%s1] sm:$0x1]
    %v23 = vld [vmem:[%s2] sm:$0x1]
    %v24 = vld [vmem:[%s3] sm:$0xff]
    %v25 = vld [vmem:[%s3 + $0x8] sm:$0xff]
    %v26 = vld [vmem:[%s3 + $0x10] sm:$0xff]
    %v27 = vld [vmem:[%s3 + $0x18] sm:$0xff]
    %v28 = vld [vmem:[%s3 + $0x20] sm:$0xff]
    %v29 = vld [vmem:[%s3 + $0x28] sm:$0xff]
    %v30 = vld [vmem:[%s3 + $0x30] sm:$0xff]
    %v31 = vld [vmem:[%s3 + $0x38] sm:$0xff]
    %v32 = vld [vmem:[%s3 + $0x40] sm:$0xff]
    %v33 = vld [vmem:[%s3 + $0x48] sm:$0xff]
    %v34 = vld [vmem:[%s3 + $0x50] sm:$0xff]
    %v35 = vld [vmem:[%s3 + $0x58] sm:$0xff]
    %v36 = vld [vmem:[%s3 + $0x60] sm:$0xff]
    %v37 = vld [vmem:[%s3 + $0x68] sm:$0xff]
    %v38 = vld [vmem:[%s3 + $0x70] sm:$0xff]
    %v39 = vld [vmem:[%s3 + $0x78] sm:$0xff]
    %v40 = vld [vmem:[%s4] sm:$0xf]
    %41 = vmatprep.subr.mxu0 0.0
    %v42 = vand.u32 %v24, 4294901760
    %43 = vmatpush1.msra.mxu0 %v42
    %44 = vmatprep.subr.mxu0 0.0
    %v45 = vand.u32 %v25, 4294901760
    %46 = vmatpush1.msra.mxu0 %v45
    %47 = vmatprep.subr.mxu0 0.0
    %v48 = vand.u32 %v26, 4294901760
    %49 = vmatpush1.msra.mxu0 %v48
    %50 = vmatprep.subr.mxu0 0.0
    %v51 = vand.u32 %v27, 4294901760
    %52 = vmatpush1.msra.mxu0 %v51
    %53 = vmatprep.subr.mxu0 0.0
    %v54 = vand.u32 %v28, 4294901760
    %55 = vmatpush1.msra.mxu0 %v54
    %56 = vmatprep.subr.mxu0 0.0
    %v57 = vand.u32 %v29, 4294901760
    %58 = vmatpush1.msra.mxu0 %v57
    %59 = vmatprep.subr.mxu0 0.0
    %v60 = vand.u32 %v30, 4294901760
    %61 = vmatpush1.msra.mxu0 %v60
    %62 = vmatprep.subr.mxu0 0.0
    %v63 = vand.u32 %v31, 4294901760
    %64 = vmatpush1.msra.mxu0 %v63
    %65 = vmatprep.subr.mxu0 0.0
    %v66 = vand.u32 %v32, 4294901760
    %67 = vmatpush1.msra.mxu0 %v66
    %68 = vmatprep.subr.mxu0 0.0
    %v69 = vand.u32 %v33, 4294901760
    %70 = vmatpush1.msra.mxu0 %v69
    %71 = vmatprep.subr.mxu0 0.0
    %v72 = vand.u32 %v34, 4294901760
    %73 = vmatpush1.msra.mxu0 %v72
    %74 = vmatprep.subr.mxu0 0.0
    %v75 = vand.u32 %v35, 4294901760
    %76 = vmatpush1.msra.mxu0 %v75
    %77 = vmatprep.subr.mxu0 0.0
    %v78 = vand.u32 %v36, 4294901760
    %79 = vmatpush1.msra.mxu0 %v78
    %80 = vmatprep.subr.mxu0 0.0
    %v81 = vand.u32 %v37, 4294901760
    %82 = vmatpush1.msra.mxu0 %v81
    %83 = vmatprep.subr.mxu0 0.0
    %v84 = vand.u32 %v38, 4294901760
    %85 = vmatpush1.msra.mxu0 %v84
    %86 = vmatprep.subr.mxu0 0.0
    %v87 = vand.u32 %v39, 4294901760
    %88 = vmatpush1.msra.mxu0 %v87
    %89 = vmatprep.subr.mxu0 0.0
    %90 = vmatpush1.msra.mxu0 0.0
    %91 = vmatprep.subr.mxu0 0.0
    %92 = vmatpush1.msra.mxu0 0.0
    %93 = vmatprep.subr.mxu0 0.0
    %94 = vmatpush1.msra.mxu0 0.0
    %95 = vmatprep.subr.mxu0 0.0
    %96 = vmatpush1.msra.mxu0 0.0
    %97 = vmatprep.subr.mxu0 0.0
    %98 = vmatpush1.msra.mxu0 0.0
    %99 = vmatprep.subr.mxu0 0.0
    %100 = vmatpush1.msra.mxu0 0.0
    %101 = vmatprep.subr.mxu0 0.0
    %102 = vmatpush1.msra.mxu0 0.0
    %103 = vmatprep.subr.mxu0 0.0
    %104 = vmatpush1.msra.mxu0 0.0
    %105 = vmatprep.subr.mxu0 0.0
    %106 = vmatpush1.msra.mxu0 0.0
    %107 = vmatprep.subr.mxu0 0.0
    %108 = vmatpush1.msra.mxu0 0.0
    %109 = vmatprep.subr.mxu0 0.0
    %110 = vmatpush1.msra.mxu0 0.0
    %111 = vmatprep.subr.mxu0 0.0
    %112 = vmatpush1.msra.mxu0 0.0
    %113 = vmatprep.subr.mxu0 0.0
    %114 = vmatpush1.msra.mxu0 0.0
    %115 = vmatprep.subr.mxu0 0.0
    %116 = vmatpush1.msra.mxu0 0.0
    %117 = vmatprep.subr.mxu0 0.0
    %118 = vmatpush1.msra.mxu0 0.0
    %119 = vmatprep.subr.mxu0 0.0
    %120 = vmatpush1.msra.mxu0 0.0
    %121 = vmatprep.mubr.f32.mxu0 0.0
    %v122 = vand.u32 %v21, 4294901760
    %v123 = vsub.f32 %v21, %v122
    %v124 = vand.u32 %v123, 4294901760
    %v125 = vsub.f32 %v123, %v124
    %v126 = vand.u32 %v125, 4294901760
    %127 = vmatmul.mubr.f32.gmra.mrb[0].mxu0 %v126
    %v128 = vpop.f32.mrb[0].mxu0
    %v129 = vadd.f32 0.0, %v128
    %v130 = vpop.f32.mrb[0].mxu0
    %131 = vdwg.mxu0
    %132 = vmatprep.subr.mxu0 0.0
    %v133 = vand.u32 %v24, 4294901760
    %v134 = vsub.f32 %v24, %v133
    %v135 = vand.u32 %v134, 4294901760
    %v136 = vsub.f32 %v134, %v135
    %v137 = vand.u32 %v136, 4294901760
    %138 = vmatpush1.msra.mxu0 %v137
    %139 = vmatprep.subr.mxu0 0.0
    %v140 = vand.u32 %v25, 4294901760
    %v141 = vsub.f32 %v25, %v140
    %v142 = vand.u32 %v141, 4294901760
    %v143 = vsub.f32 %v141, %v142
    %v144 = vand.u32 %v143, 4294901760
    %145 = vmatpush1.msra.mxu0 %v144
    %146 = vmatprep.subr.mxu0 0.0
    %v147 = vand.u32 %v26, 4294901760
    %v148 = vsub.f32 %v26, %v147
    %v149 = vand.u32 %v148, 4294901760
    %v150 = vsub.f32 %v148, %v149
    %v151 = vand.u32 %v150, 4294901760
    %152 = vmatpush1.msra.mxu0 %v151
    %153 = vmatprep.subr.mxu0 0.0
    %v154 = vand.u32 %v27, 4294901760
    %v155 = vsub.f32 %v27, %v154
    %v156 = vand.u32 %v155, 4294901760
    %v157 = vsub.f32 %v155, %v156
    %v158 = vand.u32 %v157, 4294901760
    %159 = vmatpush1.msra.mxu0 %v158
    %160 = vmatprep.subr.mxu0 0.0
    %v161 = vand.u32 %v28, 4294901760
    %v162 = vsub.f32 %v28, %v161
    %v163 = vand.u32 %v162, 4294901760
    %v164 = vsub.f32 %v162, %v163
    %v165 = vand.u32 %v164, 4294901760
    %166 = vmatpush1.msra.mxu0 %v165
    %167 = vmatprep.subr.mxu0 0.0
    %v168 = vand.u32 %v29, 4294901760
    %v169 = vsub.f32 %v29, %v168
    %v170 = vand.u32 %v169, 4294901760
    %v171 = vsub.f32 %v169, %v170
    %v172 = vand.u32 %v171, 4294901760
    %173 = vmatpush1.msra.mxu0 %v172
    %174 = vmatprep.subr.mxu0 0.0
    %v175 = vand.u32 %v30, 4294901760
    %v176 = vsub.f32 %v30, %v175
    %v177 = vand.u32 %v176, 4294901760
    %v178 = vsub.f32 %v176, %v177
    %v179 = vand.u32 %v178, 4294901760
    %180 = vmatpush1.msra.mxu0 %v179
    %181 = vmatprep.subr.mxu0 0.0
    %v182 = vand.u32 %v31, 4294901760
    %v183 = vsub.f32 %v31, %v182
    %v184 = vand.u32 %v183, 4294901760
    %v185 = vsub.f32 %v183, %v184
    %v186 = vand.u32 %v185, 4294901760
    %187 = vmatpush1.msra.mxu0 %v186
    %188 = vmatprep.subr.mxu0 0.0
    %v189 = vand.u32 %v32, 4294901760
    %v190 = vsub.f32 %v32, %v189
    %v191 = vand.u32 %v190, 4294901760
    %v192 = vsub.f32 %v190, %v191
    %v193 = vand.u32 %v192, 4294901760
    %194 = vmatpush1.msra.mxu0 %v193
    %195 = vmatprep.subr.mxu0 0.0
    %v196 = vand.u32 %v33, 4294901760
    %v197 = vsub.f32 %v33, %v196
    %v198 = vand.u32 %v197, 4294901760
    %v199 = vsub.f32 %v197, %v198
    %v200 = vand.u32 %v199, 4294901760
    %201 = vmatpush1.msra.mxu0 %v200
    %202 = vmatprep.subr.mxu0 0.0
    %v203 = vand.u32 %v34, 4294901760
    %v204 = vsub.f32 %v34, %v203
    %v205 = vand.u32 %v204, 4294901760
    %v206 = vsub.f32 %v204, %v205
    %v207 = vand.u32 %v206, 4294901760
    %208 = vmatpush1.msra.mxu0 %v207
    %209 = vmatprep.subr.mxu0 0.0
    %v210 = vand.u32 %v35, 4294901760
    %v211 = vsub.f32 %v35, %v210
    %v212 = vand.u32 %v211, 4294901760
    %v213 = vsub.f32 %v211, %v212
    %v214 = vand.u32 %v213, 4294901760
    %215 = vmatpush1.msra.mxu0 %v214
    %216 = vmatprep.subr.mxu0 0.0
    %v217 = vand.u32 %v36, 4294901760
    %v218 = vsub.f32 %v36, %v217
    %v219 = vand.u32 %v218, 4294901760
    %v220 = vsub.f32 %v218, %v219
    %v221 = vand.u32 %v220, 4294901760
    %222 = vmatpush1.msra.mxu0 %v221
    %223 = vmatprep.subr.mxu0 0.0
    %v224 = vand.u32 %v37, 4294901760
    %v225 = vsub.f32 %v37, %v224
    %v226 = vand.u32 %v225, 4294901760
    %v227 = vsub.f32 %v225, %v226
    %v228 = vand.u32 %v227, 4294901760
    %229 = vmatpush1.msra.mxu0 %v228
    %230 = vmatprep.subr.mxu0 0.0
    %v231 = vand.u32 %v38, 4294901760
    %v232 = vsub.f32 %v38, %v231
    %v233 = vand.u32 %v232, 4294901760
    %v234 = vsub.f32 %v232, %v233
    %v235 = vand.u32 %v234, 4294901760
    %236 = vmatpush1.msra.mxu0 %v235
    %237 = vmatprep.subr.mxu0 0.0
    %v238 = vand.u32 %v39, 4294901760
    %v239 = vsub.f32 %v39, %v238
    %v240 = vand.u32 %v239, 4294901760
    %v241 = vsub.f32 %v239, %v240
    %v242 = vand.u32 %v241, 4294901760
    %243 = vmatpush1.msra.mxu0 %v242
    %244 = vmatprep.subr.mxu0 0.0
    %245 = vmatpush1.msra.mxu0 0.0
    %246 = vmatprep.subr.mxu0 0.0
    %247 = vmatpush1.msra.mxu0 0.0
    %248 = vmatprep.subr.mxu0 0.0
    %249 = vmatpush1.msra.mxu0 0.0
    %250 = vmatprep.subr.mxu0 0.0
    %251 = vmatpush1.msra.mxu0 0.0
    %252 = vmatprep.subr.mxu0 0.0
    %253 = vmatpush1.msra.mxu0 0.0
    %254 = vmatprep.subr.mxu0 0.0
    %255 = vmatpush1.msra.mxu0 0.0
    %256 = vmatprep.subr.mxu0 0.0
    %257 = vmatpush1.msra.mxu0 0.0
    %258 = vmatprep.subr.mxu0 0.0
    %259 = vmatpush1.msra.mxu0 0.0
    %260 = vmatprep.subr.mxu0 0.0
    %261 = vmatpush1.msra.mxu0 0.0
    %262 = vmatprep.subr.mxu0 0.0
    %263 = vmatpush1.msra.mxu0 0.0
    %264 = vmatprep.subr.mxu0 0.0
    %265 = vmatpush1.msra.mxu0 0.0
    %266 = vmatprep.subr.mxu0 0.0
    %267 = vmatpush1.msra.mxu0 0.0
    %268 = vmatprep.subr.mxu0 0.0
    %269 = vmatpush1.msra.mxu0 0.0
    %270 = vmatprep.subr.mxu0 0.0
    %271 = vmatpush1.msra.mxu0 0.0
    %272 = vmatprep.subr.mxu0 0.0
    %273 = vmatpush1.msra.mxu0 0.0
    %274 = vmatprep.subr.mxu0 0.0
    %275 = vmatpush1.msra.mxu0 0.0
    %276 = vmatprep.mubr.f32.mxu0 0.0
    %v277 = vand.u32 %v21, 4294901760
    %278 = vmatmul.mubr.f32.gmra.mrb[0].mxu0 %v277
    %v279 = vpop.f32.mrb[0].mxu0
    %v280 = vadd.f32 %v129, %v279
    %v281 = vpop.f32.mrb[0].mxu0
    %282 = vdwg.mxu0
    %283 = vmatprep.subr.mxu0 0.0
    %v284 = vand.u32 %v24, 4294901760
    %v285 = vsub.f32 %v24, %v284
    %286 = vmatpush1.msra.mxu0 %v285
    %287 = vmatprep.subr.mxu0 0.0
    %v288 = vand.u32 %v25, 4294901760
    %v289 = vsub.f32 %v25, %v288
    %290 = vmatpush1.msra.mxu0 %v289
    %291 = vmatprep.subr.mxu0 0.0
    %v292 = vand.u32 %v26, 4294901760
    %v293 = vsub.f32 %v26, %v292
    %294 = vmatpush1.msra.mxu0 %v293
    %295 = vmatprep.subr.mxu0 0.0
    %v296 = vand.u32 %v27, 4294901760
    %v297 = vsub.f32 %v27, %v296
    %298 = vmatpush1.msra.mxu0 %v297
    %299 = vmatprep.subr.mxu0 0.0
    %v300 = vand.u32 %v28, 4294901760
    %v301 = vsub.f32 %v28, %v300
    %302 = vmatpush1.msra.mxu0 %v301
    %303 = vmatprep.subr.mxu0 0.0
    %v304 = vand.u32 %v29, 4294901760
    %v305 = vsub.f32 %v29, %v304
    %306 = vmatpush1.msra.mxu0 %v305
    %307 = vmatprep.subr.mxu0 0.0
    %v308 = vand.u32 %v30, 4294901760
    %v309 = vsub.f32 %v30, %v308
    %310 = vmatpush1.msra.mxu0 %v309
    %311 = vmatprep.subr.mxu0 0.0
    %v312 = vand.u32 %v31, 4294901760
    %v313 = vsub.f32 %v31, %v312
    %314 = vmatpush1.msra.mxu0 %v313
    %315 = vmatprep.subr.mxu0 0.0
    %v316 = vand.u32 %v32, 4294901760
    %v317 = vsub.f32 %v32, %v316
    %318 = vmatpush1.msra.mxu0 %v317
    %319 = vmatprep.subr.mxu0 0.0
    %v320 = vand.u32 %v33, 4294901760
    %v321 = vsub.f32 %v33, %v320
    %322 = vmatpush1.msra.mxu0 %v321
    %323 = vmatprep.subr.mxu0 0.0
    %v324 = vand.u32 %v34, 4294901760
    %v325 = vsub.f32 %v34, %v324
    %326 = vmatpush1.msra.mxu0 %v325
    %327 = vmatprep.subr.mxu0 0.0
    %v328 = vand.u32 %v35, 4294901760
    %v329 = vsub.f32 %v35, %v328
    %330 = vmatpush1.msra.mxu0 %v329
    %331 = vmatprep.subr.mxu0 0.0
    %v332 = vand.u32 %v36, 4294901760
    %v333 = vsub.f32 %v36, %v332
    %334 = vmatpush1.msra.mxu0 %v333
    %335 = vmatprep.subr.mxu0 0.0
    %v336 = vand.u32 %v37, 4294901760
    %v337 = vsub.f32 %v37, %v336
    %338 = vmatpush1.msra.mxu0 %v337
    %339 = vmatprep.subr.mxu0 0.0
    %v340 = vand.u32 %v38, 4294901760
    %v341 = vsub.f32 %v38, %v340
    %342 = vmatpush1.msra.mxu0 %v341
    %343 = vmatprep.subr.mxu0 0.0
    %v344 = vand.u32 %v39, 4294901760
    %v345 = vsub.f32 %v39, %v344
    %346 = vmatpush1.msra.mxu0 %v345
    %347 = vmatprep.subr.mxu0 0.0
    %348 = vmatpush1.msra.mxu0 0.0
    %349 = vmatprep.subr.mxu0 0.0
    %350 = vmatpush1.msra.mxu0 0.0
    %351 = vmatprep.subr.mxu0 0.0
    %352 = vmatpush1.msra.mxu0 0.0
    %353 = vmatprep.subr.mxu0 0.0
    %354 = vmatpush1.msra.mxu0 0.0
    %355 = vmatprep.subr.mxu0 0.0
    %356 = vmatpush1.msra.mxu0 0.0
    %357 = vmatprep.subr.mxu0 0.0
    %358 = vmatpush1.msra.mxu0 0.0
    %359 = vmatprep.subr.mxu0 0.0
    %360 = vmatpush1.msra.mxu0 0.0
    %361 = vmatprep.subr.mxu0 0.0
    %362 = vmatpush1.msra.mxu0 0.0
    %363 = vmatprep.subr.mxu0 0.0
    %364 = vmatpush1.msra.mxu0 0.0
    %365 = vmatprep.subr.mxu0 0.0
    %366 = vmatpush1.msra.mxu0 0.0
    %367 = vmatprep.subr.mxu0 0.0
    %368 = vmatpush1.msra.mxu0 0.0
    %369 = vmatprep.subr.mxu0 0.0
    %370 = vmatpush1.msra.mxu0 0.0
    %371 = vmatprep.subr.mxu0 0.0
    %372 = vmatpush1.msra.mxu0 0.0
    %373 = vmatprep.subr.mxu0 0.0
    %374 = vmatpush1.msra.mxu0 0.0
    %375 = vmatprep.subr.mxu0 0.0
    %376 = vmatpush1.msra.mxu0 0.0
    %377 = vmatprep.subr.mxu0 0.0
    %378 = vmatpush1.msra.mxu0 0.0
    %379 = vmatprep.mubr.f32.mxu0 0.0
    %v380 = vand.u32 %v21, 4294901760
    %v381 = vsub.f32 %v21, %v380
    %382 = vmatmul.mubr.f32.gmra.mrb[0].mxu0 %v381
    %v383 = vpop.f32.mrb[0].mxu0
    %v384 = vadd.f32 %v280, %v383
    %v385 = vpop.f32.mrb[0].mxu0
    %386 = vdwg.mxu0
    %387 = vmatprep.subr.mxu0 0.0
    %v388 = vand.u32 %v24, 4294901760
    %389 = vmatpush1.msra.mxu0 %v388
    %390 = vmatprep.subr.mxu0 0.0
    %v391 = vand.u32 %v25, 4294901760
    %392 = vmatpush1.msra.mxu0 %v391
    %393 = vmatprep.subr.mxu0 0.0
    %v394 = vand.u32 %v26, 4294901760
    %395 = vmatpush1.msra.mxu0 %v394
    %396 = vmatprep.subr.mxu0 0.0
    %v397 = vand.u32 %v27, 4294901760
    %398 = vmatpush1.msra.mxu0 %v397
    %399 = vmatprep.subr.mxu0 0.0
    %v400 = vand.u32 %v28, 4294901760
    %401 = vmatpush1.msra.mxu0 %v400
    %402 = vmatprep.subr.mxu0 0.0
    %v403 = vand.u32 %v29, 4294901760
    %404 = vmatpush1.msra.mxu0 %v403
    %405 = vmatprep.subr.mxu0 0.0
    %v406 = vand.u32 %v30, 4294901760
    %407 = vmatpush1.msra.mxu0 %v406
    %408 = vmatprep.subr.mxu0 0.0
    %v409 = vand.u32 %v31, 4294901760
    %410 = vmatpush1.msra.mxu0 %v409
    %411 = vmatprep.subr.mxu0 0.0
    %v412 = vand.u32 %v32, 4294901760
    %413 = vmatpush1.msra.mxu0 %v412
    %414 = vmatprep.subr.mxu0 0.0
    %v415 = vand.u32 %v33, 4294901760
    %416 = vmatpush1.msra.mxu0 %v415
    %417 = vmatprep.subr.mxu0 0.0
    %v418 = vand.u32 %v34, 4294901760
    %419 = vmatpush1.msra.mxu0 %v418
    %420 = vmatprep.subr.mxu0 0.0
    %v421 = vand.u32 %v35, 4294901760
    %422 = vmatpush1.msra.mxu0 %v421
    %423 = vmatprep.subr.mxu0 0.0
    %v424 = vand.u32 %v36, 4294901760
    %425 = vmatpush1.msra.mxu0 %v424
    %426 = vmatprep.subr.mxu0 0.0
    %v427 = vand.u32 %v37, 4294901760
    %428 = vmatpush1.msra.mxu0 %v427
    %429 = vmatprep.subr.mxu0 0.0
    %v430 = vand.u32 %v38, 4294901760
    %431 = vmatpush1.msra.mxu0 %v430
    %432 = vmatprep.subr.mxu0 0.0
    %v433 = vand.u32 %v39, 4294901760
    %434 = vmatpush1.msra.mxu0 %v433
    %435 = vmatprep.subr.mxu0 0.0
    %436 = vmatpush1.msra.mxu0 0.0
    %437 = vmatprep.subr.mxu0 0.0
    %438 = vmatpush1.msra.mxu0 0.0
    %439 = vmatprep.subr.mxu0 0.0
    %440 = vmatpush1.msra.mxu0 0.0
    %441 = vmatprep.subr.mxu0 0.0
    %442 = vmatpush1.msra.mxu0 0.0
    %443 = vmatprep.subr.mxu0 0.0
    %444 = vmatpush1.msra.mxu0 0.0
    %445 = vmatprep.subr.mxu0 0.0
    %446 = vmatpush1.msra.mxu0 0.0
    %447 = vmatprep.subr.mxu0 0.0
    %448 = vmatpush1.msra.mxu0 0.0
    %449 = vmatprep.subr.mxu0 0.0
    %450 = vmatpush1.msra.mxu0 0.0
    %451 = vmatprep.subr.mxu0 0.0
    %452 = vmatpush1.msra.mxu0 0.0
    %453 = vmatprep.subr.mxu0 0.0
    %454 = vmatpush1.msra.mxu0 0.0
    %455 = vmatprep.subr.mxu0 0.0
    %456 = vmatpush1.msra.mxu0 0.0
    %457 = vmatprep.subr.mxu0 0.0
    %458 = vmatpush1.msra.mxu0 0.0
    %459 = vmatprep.subr.mxu0 0.0
    %460 = vmatpush1.msra.mxu0 0.0
    %461 = vmatprep.subr.mxu0 0.0
    %462 = vmatpush1.msra.mxu0 0.0
    %463 = vmatprep.subr.mxu0 0.0
    %464 = vmatpush1.msra.mxu0 0.0
    %465 = vmatprep.subr.mxu0 0.0
    %466 = vmatpush1.msra.mxu0 0.0
    %467 = vmatprep.mubr.f32.mxu0 0.0
    %v468 = vand.u32 %v21, 4294901760
    %v469 = vsub.f32 %v21, %v468
    %v470 = vand.u32 %v469, 4294901760
    %471 = vmatmul.mubr.f32.gmra.mrb[0].mxu0 %v470
    %v472 = vpop.f32.mrb[0].mxu0
    %v473 = vadd.f32 %v384, %v472
    %v474 = vpop.f32.mrb[0].mxu0
    %475 = vdwg.mxu0
    %476 = vmatprep.subr.mxu0 0.0
    %v477 = vand.u32 %v24, 4294901760
    %v478 = vsub.f32 %v24, %v477
    %v479 = vand.u32 %v478, 4294901760
    %480 = vmatpush1.msra.mxu0 %v479
    %481 = vmatprep.subr.mxu0 0.0
    %v482 = vand.u32 %v25, 4294901760
    %v483 = vsub.f32 %v25, %v482
    %v484 = vand.u32 %v483, 4294901760
    %485 = vmatpush1.msra.mxu0 %v484
    %486 = vmatprep.subr.mxu0 0.0
    %v487 = vand.u32 %v26, 4294901760
    %v488 = vsub.f32 %v26, %v487
    %v489 = vand.u32 %v488, 4294901760
    %490 = vmatpush1.msra.mxu0 %v489
    %491 = vmatprep.subr.mxu0 0.0
    %v492 = vand.u32 %v27, 4294901760
    %v493 = vsub.f32 %v27, %v492
    %v494 = vand.u32 %v493, 4294901760
    %495 = vmatpush1.msra.mxu0 %v494
    %496 = vmatprep.subr.mxu0 0.0
    %v497 = vand.u32 %v28, 4294901760
    %v498 = vsub.f32 %v28, %v497
    %v499 = vand.u32 %v498, 4294901760
    %500 = vmatpush1.msra.mxu0 %v499
    %501 = vmatprep.subr.mxu0 0.0
    %v502 = vand.u32 %v29, 4294901760
    %v503 = vsub.f32 %v29, %v502
    %v504 = vand.u32 %v503, 4294901760
    %505 = vmatpush1.msra.mxu0 %v504
    %506 = vmatprep.subr.mxu0 0.0
    %v507 = vand.u32 %v30, 4294901760
    %v508 = vsub.f32 %v30, %v507
    %v509 = vand.u32 %v508, 4294901760
    %510 = vmatpush1.msra.mxu0 %v509
    %511 = vmatprep.subr.mxu0 0.0
    %v512 = vand.u32 %v31, 4294901760
    %v513 = vsub.f32 %v31, %v512
    %v514 = vand.u32 %v513, 4294901760
    %515 = vmatpush1.msra.mxu0 %v514
    %516 = vmatprep.subr.mxu0 0.0
    %v517 = vand.u32 %v32, 4294901760
    %v518 = vsub.f32 %v32, %v517
    %v519 = vand.u32 %v518, 4294901760
    %520 = vmatpush1.msra.mxu0 %v519
    %521 = vmatprep.subr.mxu0 0.0
    %v522 = vand.u32 %v33, 4294901760
    %v523 = vsub.f32 %v33, %v522
    %v524 = vand.u32 %v523, 4294901760
    %525 = vmatpush1.msra.mxu0 %v524
    %526 = vmatprep.subr.mxu0 0.0
    %v527 = vand.u32 %v34, 4294901760
    %v528 = vsub.f32 %v34, %v527
    %v529 = vand.u32 %v528, 4294901760
    %530 = vmatpush1.msra.mxu0 %v529
    %531 = vmatprep.subr.mxu0 0.0
    %v532 = vand.u32 %v35, 4294901760
    %v533 = vsub.f32 %v35, %v532
    %v534 = vand.u32 %v533, 4294901760
    %535 = vmatpush1.msra.mxu0 %v534
    %536 = vmatprep.subr.mxu0 0.0
    %v537 = vand.u32 %v36, 4294901760
    %v538 = vsub.f32 %v36, %v537
    %v539 = vand.u32 %v538, 4294901760
    %540 = vmatpush1.msra.mxu0 %v539
    %541 = vmatprep.subr.mxu0 0.0
    %v542 = vand.u32 %v37, 4294901760
    %v543 = vsub.f32 %v37, %v542
    %v544 = vand.u32 %v543, 4294901760
    %545 = vmatpush1.msra.mxu0 %v544
    %546 = vmatprep.subr.mxu0 0.0
    %v547 = vand.u32 %v38, 4294901760
    %v548 = vsub.f32 %v38, %v547
    %v549 = vand.u32 %v548, 4294901760
    %550 = vmatpush1.msra.mxu0 %v549
    %551 = vmatprep.subr.mxu0 0.0
    %v552 = vand.u32 %v39, 4294901760
    %v553 = vsub.f32 %v39, %v552
    %v554 = vand.u32 %v553, 4294901760
    %555 = vmatpush1.msra.mxu0 %v554
    %556 = vmatprep.subr.mxu0 0.0
    %557 = vmatpush1.msra.mxu0 0.0
    %558 = vmatprep.subr.mxu0 0.0
    %559 = vmatpush1.msra.mxu0 0.0
    %560 = vmatprep.subr.mxu0 0.0
    %561 = vmatpush1.msra.mxu0 0.0
    %562 = vmatprep.subr.mxu0 0.0
    %563 = vmatpush1.msra.mxu0 0.0
    %564 = vmatprep.subr.mxu0 0.0
    %565 = vmatpush1.msra.mxu0 0.0
    %566 = vmatprep.subr.mxu0 0.0
    %567 = vmatpush1.msra.mxu0 0.0
    %568 = vmatprep.subr.mxu0 0.0
    %569 = vmatpush1.msra.mxu0 0.0
    %570 = vmatprep.subr.mxu0 0.0
    %571 = vmatpush1.msra.mxu0 0.0
    %572 = vmatprep.subr.mxu0 0.0
    %573 = vmatpush1.msra.mxu0 0.0
    %574 = vmatprep.subr.mxu0 0.0
    %575 = vmatpush1.msra.mxu0 0.0
    %576 = vmatprep.subr.mxu0 0.0
    %577 = vmatpush1.msra.mxu0 0.0
    %578 = vmatprep.subr.mxu0 0.0
    %579 = vmatpush1.msra.mxu0 0.0
    %580 = vmatprep.subr.mxu0 0.0
    %581 = vmatpush1.msra.mxu0 0.0
    %582 = vmatprep.subr.mxu0 0.0
    %583 = vmatpush1.msra.mxu0 0.0
    %584 = vmatprep.subr.mxu0 0.0
    %585 = vmatpush1.msra.mxu0 0.0
    %586 = vmatprep.subr.mxu0 0.0
    %587 = vmatpush1.msra.mxu0 0.0
    %588 = vmatprep.mubr.f32.mxu0 0.0
    %v589 = vand.u32 %v21, 4294901760
    %590 = vmatmul.mubr.f32.gmra.mrb[0].mxu0 %v589
    %v591 = vpop.f32.mrb[0].mxu0
    %v592 = vadd.f32 %v473, %v591
    %v593 = vpop.f32.mrb[0].mxu0
    %594 = vdwg.mxu0
    %595 = vmatprep.subr.mxu0 0.0
    %v596 = vand.u32 %v24, 4294901760
    %597 = vmatpush1.msra.mxu0 %v596
    %598 = vmatprep.subr.mxu0 0.0
    %v599 = vand.u32 %v25, 4294901760
    %600 = vmatpush1.msra.mxu0 %v599
    %601 = vmatprep.subr.mxu0 0.0
    %v602 = vand.u32 %v26, 4294901760
    %603 = vmatpush1.msra.mxu0 %v602
    %604 = vmatprep.subr.mxu0 0.0
    %v605 = vand.u32 %v27, 4294901760
    %606 = vmatpush1.msra.mxu0 %v605
    %607 = vmatprep.subr.mxu0 0.0
    %v608 = vand.u32 %v28, 4294901760
    %609 = vmatpush1.msra.mxu0 %v608
    %610 = vmatprep.subr.mxu0 0.0
    %v611 = vand.u32 %v29, 4294901760
    %612 = vmatpush1.msra.mxu0 %v611
    %613 = vmatprep.subr.mxu0 0.0
    %v614 = vand.u32 %v30, 4294901760
    %615 = vmatpush1.msra.mxu0 %v614
    %616 = vmatprep.subr.mxu0 0.0
    %v617 = vand.u32 %v31, 4294901760
    %618 = vmatpush1.msra.mxu0 %v617
    %619 = vmatprep.subr.mxu0 0.0
    %v620 = vand.u32 %v32, 4294901760
    %621 = vmatpush1.msra.mxu0 %v620
    %622 = vmatprep.subr.mxu0 0.0
    %v623 = vand.u32 %v33, 4294901760
    %624 = vmatpush1.msra.mxu0 %v623
    %625 = vmatprep.subr.mxu0 0.0
    %v626 = vand.u32 %v34, 4294901760
    %627 = vmatpush1.msra.mxu0 %v626
    %628 = vmatprep.subr.mxu0 0.0
    %v629 = vand.u32 %v35, 4294901760
    %630 = vmatpush1.msra.mxu0 %v629
    %631 = vmatprep.subr.mxu0 0.0
    %v632 = vand.u32 %v36, 4294901760
    %633 = vmatpush1.msra.mxu0 %v632
    %634 = vmatprep.subr.mxu0 0.0
    %v635 = vand.u32 %v37, 4294901760
    %636 = vmatpush1.msra.mxu0 %v635
    %637 = vmatprep.subr.mxu0 0.0
    %v638 = vand.u32 %v38, 4294901760
    %639 = vmatpush1.msra.mxu0 %v638
    %640 = vmatprep.subr.mxu0 0.0
    %v641 = vand.u32 %v39, 4294901760
    %642 = vmatpush1.msra.mxu0 %v641
    %643 = vmatprep.subr.mxu0 0.0
    %644 = vmatpush1.msra.mxu0 0.0
    %645 = vmatprep.subr.mxu0 0.0
    %646 = vmatpush1.msra.mxu0 0.0
    %647 = vmatprep.subr.mxu0 0.0
    %648 = vmatpush1.msra.mxu0 0.0
    %649 = vmatprep.subr.mxu0 0.0
    %650 = vmatpush1.msra.mxu0 0.0
    %651 = vmatprep.subr.mxu0 0.0
    %652 = vmatpush1.msra.mxu0 0.0
    %653 = vmatprep.subr.mxu0 0.0
    %654 = vmatpush1.msra.mxu0 0.0
    %655 = vmatprep.subr.mxu0 0.0
    %656 = vmatpush1.msra.mxu0 0.0
    %657 = vmatprep.subr.mxu0 0.0
    %658 = vmatpush1.msra.mxu0 0.0
    %659 = vmatprep.subr.mxu0 0.0
    %660 = vmatpush1.msra.mxu0 0.0
    %661 = vmatprep.subr.mxu0 0.0
    %662 = vmatpush1.msra.mxu0 0.0
    %663 = vmatprep.subr.mxu0 0.0
    %664 = vmatpush1.msra.mxu0 0.0
    %665 = vmatprep.subr.mxu0 0.0
    %666 = vmatpush1.msra.mxu0 0.0
    %667 = vmatprep.subr.mxu0 0.0
    %668 = vmatpush1.msra.mxu0 0.0
    %669 = vmatprep.subr.mxu0 0.0
    %670 = vmatpush1.msra.mxu0 0.0
    %671 = vmatprep.subr.mxu0 0.0
    %672 = vmatpush1.msra.mxu0 0.0
    %673 = vmatprep.subr.mxu0 0.0
    %674 = vmatpush1.msra.mxu0 0.0
    %675 = vmatprep.mubr.f32.mxu0 0.0
    %v676 = vand.u32 %v21, 4294901760
    %677 = vmatmul.mubr.f32.gmra.mrb[0].mxu0 %v676
    %v678 = vpop.f32.mrb[0].mxu0
    %v679 = vadd.f32 %v592, %v678
    %v680 = vpop.f32.mrb[0].mxu0
    %681 = vdwg.mxu0
    %v682 = vmul.f32 %v679, 0.03125
    %vm683 = vcmask 31744
    %v685 = vsel %vm683, %v682, 0
    %vm687 = vcmask 1043456
    %v689 = vsel %vm687, %v40, 0
    %691 = vmatprep.subr.mxu0 0.0
    %v692 = vand.u32 %v689, 4294901760
    %693 = vmatpush1.msra.mxu0 %v692
    %694 = vmatprep.subr.mxu0 0.0
    %695 = vmatpush1.msra.mxu0 0.0
    %696 = vmatprep.subr.mxu0 0.0
    %697 = vmatpush1.msra.mxu0 0.0
    %698 = vmatprep.subr.mxu0 0.0
    %699 = vmatpush1.msra.mxu0 0.0
    %700 = vmatprep.subr.mxu0 0.0
    %701 = vmatpush1.msra.mxu0 0.0
    %702 = vmatprep.subr.mxu0 0.0
    %703 = vmatpush1.msra.mxu0 0.0
    %704 = vmatprep.subr.mxu0 0.0
    %705 = vmatpush1.msra.mxu0 0.0
    %706 = vmatprep.subr.mxu0 0.0
    %707 = vmatpush1.msra.mxu0 0.0
    %708 = vmatprep.subr.mxu0 0.0
    %709 = vmatpush1.msra.mxu0 0.0
    %710 = vmatprep.subr.mxu0 0.0
    %711 = vmatpush1.msra.mxu0 0.0
    %712 = vmatprep.subr.mxu0 0.0
    %713 = vmatpush1.msra.mxu0 0.0
    %714 = vmatprep.subr.mxu0 0.0
    %715 = vmatpush1.msra.mxu0 0.0
    %716 = vmatprep.subr.mxu0 0.0
    %717 = vmatpush1.msra.mxu0 0.0
    %718 = vmatprep.subr.mxu0 0.0
    %719 = vmatpush1.msra.mxu0 0.0
    %720 = vmatprep.subr.mxu0 0.0
    %721 = vmatpush1.msra.mxu0 0.0
    %722 = vmatprep.subr.mxu0 0.0
    %723 = vmatpush1.msra.mxu0 0.0
    %724 = vmatprep.subr.mxu0 0.0
    %725 = vmatpush1.msra.mxu0 0.0
    %726 = vmatprep.subr.mxu0 0.0
    %727 = vmatpush1.msra.mxu0 0.0
    %728 = vmatprep.subr.mxu0 0.0
    %729 = vmatpush1.msra.mxu0 0.0
    %730 = vmatprep.subr.mxu0 0.0
    %731 = vmatpush1.msra.mxu0 0.0
    %732 = vmatprep.subr.mxu0 0.0
    %733 = vmatpush1.msra.mxu0 0.0
    %734 = vmatprep.subr.mxu0 0.0
    %735 = vmatpush1.msra.mxu0 0.0
    %736 = vmatprep.subr.mxu0 0.0
    %737 = vmatpush1.msra.mxu0 0.0
    %738 = vmatprep.subr.mxu0 0.0
    %739 = vmatpush1.msra.mxu0 0.0
    %740 = vmatprep.subr.mxu0 0.0
    %741 = vmatpush1.msra.mxu0 0.0
    %742 = vmatprep.subr.mxu0 0.0
    %743 = vmatpush1.msra.mxu0 0.0
    %744 = vmatprep.subr.mxu0 0.0
    %745 = vmatpush1.msra.mxu0 0.0
    %746 = vmatprep.subr.mxu0 0.0
    %747 = vmatpush1.msra.mxu0 0.0
    %748 = vmatprep.subr.mxu0 0.0
    %749 = vmatpush1.msra.mxu0 0.0
    %750 = vmatprep.subr.mxu0 0.0
    %751 = vmatpush1.msra.mxu0 0.0
    %752 = vmatprep.subr.mxu0 0.0
    %753 = vmatpush1.msra.mxu0 0.0
    %754 = vmatprep.subr.mxu0 0.0
    %755 = vmatpush1.msra.mxu0 0.0
    %756 = vmatprep.mubr.f32.mxu0 0.0
    %v757 = vand.u32 %v685, 4294901760
    %v758 = vsub.f32 %v685, %v757
    %v759 = vand.u32 %v758, 4294901760
    %v760 = vsub.f32 %v758, %v759
    %v761 = vand.u32 %v760, 4294901760
    %762 = vmatmul.mubr.f32.gmra.mrb[0].mxu0 %v761
    %v763 = vpop.f32.mrb[0].mxu0
    %v764 = vadd.f32 0.0, %v763
    %v765 = vpop.f32.mrb[0].mxu0
    %766 = vdwg.mxu0
    %767 = vmatprep.subr.mxu0 0.0
    %v768 = vand.u32 %v689, 4294901760
    %v769 = vsub.f32 %v689, %v768
    %v770 = vand.u32 %v769, 4294901760
    %v771 = vsub.f32 %v769, %v770
    %v772 = vand.u32 %v771, 4294901760
    %773 = vmatpush1.msra.mxu0 %v772
    %774 = vmatprep.subr.mxu0 0.0
    %775 = vmatpush1.msra.mxu0 0.0
    %776 = vmatprep.subr.mxu0 0.0
    %777 = vmatpush1.msra.mxu0 0.0
    %778 = vmatprep.subr.mxu0 0.0
    %779 = vmatpush1.msra.mxu0 0.0
    %780 = vmatprep.subr.mxu0 0.0
    %781 = vmatpush1.msra.mxu0 0.0
    %782 = vmatprep.subr.mxu0 0.0
    %783 = vmatpush1.msra.mxu0 0.0
    %784 = vmatprep.subr.mxu0 0.0
    %785 = vmatpush1.msra.mxu0 0.0
    %786 = vmatprep.subr.mxu0 0.0
    %787 = vmatpush1.msra.mxu0 0.0
    %788 = vmatprep.subr.mxu0 0.0
    %789 = vmatpush1.msra.mxu0 0.0
    %790 = vmatprep.subr.mxu0 0.0
    %791 = vmatpush1.msra.mxu0 0.0
    %792 = vmatprep.subr.mxu0 0.0
    %793 = vmatpush1.msra.mxu0 0.0
    %794 = vmatprep.subr.mxu0 0.0
    %795 = vmatpush1.msra.mxu0 0.0
    %796 = vmatprep.subr.mxu0 0.0
    %797 = vmatpush1.msra.mxu0 0.0
    %798 = vmatprep.subr.mxu0 0.0
    %799 = vmatpush1.msra.mxu0 0.0
    %800 = vmatprep.subr.mxu0 0.0
    %801 = vmatpush1.msra.mxu0 0.0
    %802 = vmatprep.subr.mxu0 0.0
    %803 = vmatpush1.msra.mxu0 0.0
    %804 = vmatprep.subr.mxu0 0.0
    %805 = vmatpush1.msra.mxu0 0.0
    %806 = vmatprep.subr.mxu0 0.0
    %807 = vmatpush1.msra.mxu0 0.0
    %808 = vmatprep.subr.mxu0 0.0
    %809 = vmatpush1.msra.mxu0 0.0
    %810 = vmatprep.subr.mxu0 0.0
    %811 = vmatpush1.msra.mxu0 0.0
    %812 = vmatprep.subr.mxu0 0.0
    %813 = vmatpush1.msra.mxu0 0.0
    %814 = vmatprep.subr.mxu0 0.0
    %815 = vmatpush1.msra.mxu0 0.0
    %816 = vmatprep.subr.mxu0 0.0
    %817 = vmatpush1.msra.mxu0 0.0
    %818 = vmatprep.subr.mxu0 0.0
    %819 = vmatpush1.msra.mxu0 0.0
    %820 = vmatprep.subr.mxu0 0.0
    %821 = vmatpush1.msra.mxu0 0.0
    %822 = vmatprep.subr.mxu0 0.0
    %823 = vmatpush1.msra.mxu0 0.0
    %824 = vmatprep.subr.mxu0 0.0
    %825 = vmatpush1.msra.mxu0 0.0
    %826 = vmatprep.subr.mxu0 0.0
    %827 = vmatpush1.msra.mxu0 0.0
    %828 = vmatprep.subr.mxu0 0.0
    %829 = vmatpush1.msra.mxu0 0.0
    %830 = vmatprep.subr.mxu0 0.0
    %831 = vmatpush1.msra.mxu0 0.0
    %832 = vmatprep.subr.mxu0 0.0
    %833 = vmatpush1.msra.mxu0 0.0
    %834 = vmatprep.subr.mxu0 0.0
    %835 = vmatpush1.msra.mxu0 0.0
    %836 = vmatprep.mubr.f32.mxu0 0.0
    %v837 = vand.u32 %v685, 4294901760
    %838 = vmatmul.mubr.f32.gmra.mrb[0].mxu0 %v837
    %v839 = vpop.f32.mrb[0].mxu0
    %v840 = vadd.f32 %v764, %v839
    %v841 = vpop.f32.mrb[0].mxu0
    %842 = vdwg.mxu0
    %843 = vmatprep.subr.mxu0 0.0
    %v844 = vand.u32 %v689, 4294901760
    %v845 = vsub.f32 %v689, %v844
    %846 = vmatpush1.msra.mxu0 %v845
    %847 = vmatprep.subr.mxu0 0.0
    %848 = vmatpush1.msra.mxu0 0.0
    %849 = vmatprep.subr.mxu0 0.0
    %850 = vmatpush1.msra.mxu0 0.0
    %851 = vmatprep.subr.mxu0 0.0
    %852 = vmatpush1.msra.mxu0 0.0
    %853 = vmatprep.subr.mxu0 0.0
    %854 = vmatpush1.msra.mxu0 0.0
    %855 = vmatprep.subr.mxu0 0.0
    %856 = vmatpush1.msra.mxu0 0.0
    %857 = vmatprep.subr.mxu0 0.0
    %858 = vmatpush1.msra.mxu0 0.0
    %859 = vmatprep.subr.mxu0 0.0
    %860 = vmatpush1.msra.mxu0 0.0
    %861 = vmatprep.subr.mxu0 0.0
    %862 = vmatpush1.msra.mxu0 0.0
    %863 = vmatprep.subr.mxu0 0.0
    %864 = vmatpush1.msra.mxu0 0.0
    %865 = vmatprep.subr.mxu0 0.0
    %866 = vmatpush1.msra.mxu0 0.0
    %867 = vmatprep.subr.mxu0 0.0
    %868 = vmatpush1.msra.mxu0 0.0
    %869 = vmatprep.subr.mxu0 0.0
    %870 = vmatpush1.msra.mxu0 0.0
    %871 = vmatprep.subr.mxu0 0.0
    %872 = vmatpush1.msra.mxu0 0.0
    %873 = vmatprep.subr.mxu0 0.0
    %874 = vmatpush1.msra.mxu0 0.0
    %875 = vmatprep.subr.mxu0 0.0
    %876 = vmatpush1.msra.mxu0 0.0
    %877 = vmatprep.subr.mxu0 0.0
    %878 = vmatpush1.msra.mxu0 0.0
    %879 = vmatprep.subr.mxu0 0.0
    %880 = vmatpush1.msra.mxu0 0.0
    %881 = vmatprep.subr.mxu0 0.0
    %882 = vmatpush1.msra.mxu0 0.0
    %883 = vmatprep.subr.mxu0 0.0
    %884 = vmatpush1.msra.mxu0 0.0
    %885 = vmatprep.subr.mxu0 0.0
    %886 = vmatpush1.msra.mxu0 0.0
    %887 = vmatprep.subr.mxu0 0.0
    %888 = vmatpush1.msra.mxu0 0.0
    %889 = vmatprep.subr.mxu0 0.0
    %890 = vmatpush1.msra.mxu0 0.0
    %891 = vmatprep.subr.mxu0 0.0
    %892 = vmatpush1.msra.mxu0 0.0
    %893 = vmatprep.subr.mxu0 0.0
    %894 = vmatpush1.msra.mxu0 0.0
    %895 = vmatprep.subr.mxu0 0.0
    %896 = vmatpush1.msra.mxu0 0.0
    %897 = vmatprep.subr.mxu0 0.0
    %898 = vmatpush1.msra.mxu0 0.0
    %899 = vmatprep.subr.mxu0 0.0
    %900 = vmatpush1.msra.mxu0 0.0
    %901 = vmatprep.subr.mxu0 0.0
    %902 = vmatpush1.msra.mxu0 0.0
    %903 = vmatprep.subr.mxu0 0.0
    %904 = vmatpush1.msra.mxu0 0.0
    %905 = vmatprep.subr.mxu0 0.0
    %906 = vmatpush1.msra.mxu0 0.0
    %907 = vmatprep.subr.mxu0 0.0
    %908 = vmatpush1.msra.mxu0 0.0
    %909 = vmatprep.mubr.f32.mxu0 0.0
    %v910 = vand.u32 %v685, 4294901760
    %v911 = vsub.f32 %v685, %v910
    %912 = vmatmul.mubr.f32.gmra.mrb[0].mxu0 %v911
    %v913 = vpop.f32.mrb[0].mxu0
    %v914 = vadd.f32 %v840, %v913
    %v915 = vpop.f32.mrb[0].mxu0
    %916 = vdwg.mxu0
    %917 = vmatprep.subr.mxu0 0.0
    %v918 = vand.u32 %v689, 4294901760
    %919 = vmatpush1.msra.mxu0 %v918
    %920 = vmatprep.subr.mxu0 0.0
    %921 = vmatpush1.msra.mxu0 0.0
    %922 = vmatprep.subr.mxu0 0.0
    %923 = vmatpush1.msra.mxu0 0.0
    %924 = vmatprep.subr.mxu0 0.0
    %925 = vmatpush1.msra.mxu0 0.0
    %926 = vmatprep.subr.mxu0 0.0
    %927 = vmatpush1.msra.mxu0 0.0
    %928 = vmatprep.subr.mxu0 0.0
    %929 = vmatpush1.msra.mxu0 0.0
    %930 = vmatprep.subr.mxu0 0.0
    %931 = vmatpush1.msra.mxu0 0.0
    %932 = vmatprep.subr.mxu0 0.0
    %933 = vmatpush1.msra.mxu0 0.0
    %934 = vmatprep.subr.mxu0 0.0
    %935 = vmatpush1.msra.mxu0 0.0
    %936 = vmatprep.subr.mxu0 0.0
    %937 = vmatpush1.msra.mxu0 0.0
    %938 = vmatprep.subr.mxu0 0.0
    %939 = vmatpush1.msra.mxu0 0.0
    %940 = vmatprep.subr.mxu0 0.0
    %941 = vmatpush1.msra.mxu0 0.0
    %942 = vmatprep.subr.mxu0 0.0
    %943 = vmatpush1.msra.mxu0 0.0
    %944 = vmatprep.subr.mxu0 0.0
    %945 = vmatpush1.msra.mxu0 0.0
    %946 = vmatprep.subr.mxu0 0.0
    %947 = vmatpush1.msra.mxu0 0.0
    %948 = vmatprep.subr.mxu0 0.0
    %949 = vmatpush1.msra.mxu0 0.0
    %950 = vmatprep.subr.mxu0 0.0
    %951 = vmatpush1.msra.mxu0 0.0
    %952 = vmatprep.subr.mxu0 0.0
    %953 = vmatpush1.msra.mxu0 0.0
    %954 = vmatprep.subr.mxu0 0.0
    %955 = vmatpush1.msra.mxu0 0.0
    %956 = vmatprep.subr.mxu0 0.0
    %957 = vmatpush1.msra.mxu0 0.0
    %958 = vmatprep.subr.mxu0 0.0
    %959 = vmatpush1.msra.mxu0 0.0
    %960 = vmatprep.subr.mxu0 0.0
    %961 = vmatpush1.msra.mxu0 0.0
    %962 = vmatprep.subr.mxu0 0.0
    %963 = vmatpush1.msra.mxu0 0.0
    %964 = vmatprep.subr.mxu0 0.0
    %965 = vmatpush1.msra.mxu0 0.0
    %966 = vmatprep.subr.mxu0 0.0
    %967 = vmatpush1.msra.mxu0 0.0
    %968 = vmatprep.subr.mxu0 0.0
    %969 = vmatpush1.msra.mxu0 0.0
    %970 = vmatprep.subr.mxu0 0.0
    %971 = vmatpush1.msra.mxu0 0.0
    %972 = vmatprep.subr.mxu0 0.0
    %973 = vmatpush1.msra.mxu0 0.0
    %974 = vmatprep.subr.mxu0 0.0
    %975 = vmatpush1.msra.mxu0 0.0
    %976 = vmatprep.subr.mxu0 0.0
    %977 = vmatpush1.msra.mxu0 0.0
    %978 = vmatprep.subr.mxu0 0.0
    %979 = vmatpush1.msra.mxu0 0.0
    %980 = vmatprep.subr.mxu0 0.0
    %981 = vmatpush1.msra.mxu0 0.0
    %982 = vmatprep.mubr.f32.mxu0 0.0
    %v983 = vand.u32 %v685, 4294901760
    %v984 = vsub.f32 %v685, %v983
    %v985 = vand.u32 %v984, 4294901760
    %986 = vmatmul.mubr.f32.gmra.mrb[0].mxu0 %v985
    %v987 = vpop.f32.mrb[0].mxu0
    %v988 = vadd.f32 %v914, %v987
    %v989 = vpop.f32.mrb[0].mxu0
    %990 = vdwg.mxu0
    %991 = vmatprep.subr.mxu0 0.0
    %v992 = vand.u32 %v689, 4294901760
    %v993 = vsub.f32 %v689, %v992
    %v994 = vand.u32 %v993, 4294901760
    %995 = vmatpush1.msra.mxu0 %v994
    %996 = vmatprep.subr.mxu0 0.0
    %997 = vmatpush1.msra.mxu0 0.0
    %998 = vmatprep.subr.mxu0 0.0
    %999 = vmatpush1.msra.mxu0 0.0
    %1000 = vmatprep.subr.mxu0 0.0
    %1001 = vmatpush1.msra.mxu0 0.0
    %1002 = vmatprep.subr.mxu0 0.0
    %1003 = vmatpush1.msra.mxu0 0.0
    %1004 = vmatprep.subr.mxu0 0.0
    %1005 = vmatpush1.msra.mxu0 0.0
    %1006 = vmatprep.subr.mxu0 0.0
    %1007 = vmatpush1.msra.mxu0 0.0
    %1008 = vmatprep.subr.mxu0 0.0
    %1009 = vmatpush1.msra.mxu0 0.0
    %1010 = vmatprep.subr.mxu0 0.0
    %1011 = vmatpush1.msra.mxu0 0.0
    %1012 = vmatprep.subr.mxu0 0.0
    %1013 = vmatpush1.msra.mxu0 0.0
    %1014 = vmatprep.subr.mxu0 0.0
    %1015 = vmatpush1.msra.mxu0 0.0
    %1016 = vmatprep.subr.mxu0 0.0
    %1017 = vmatpush1.msra.mxu0 0.0
    %1018 = vmatprep.subr.mxu0 0.0
    %1019 = vmatpush1.msra.mxu0 0.0
    %1020 = vmatprep.subr.mxu0 0.0
    %1021 = vmatpush1.msra.mxu0 0.0
    %1022 = vmatprep.subr.mxu0 0.0
    %1023 = vmatpush1.msra.mxu0 0.0
    %1024 = vmatprep.subr.mxu0 0.0
    %1025 = vmatpush1.msra.mxu0 0.0
    %1026 = vmatprep.subr.mxu0 0.0
    %1027 = vmatpush1.msra.mxu0 0.0
    %1028 = vmatprep.subr.mxu0 0.0
    %1029 = vmatpush1.msra.mxu0 0.0
    %1030 = vmatprep.subr.mxu0 0.0
    %1031 = vmatpush1.msra.mxu0 0.0
    %1032 = vmatprep.subr.mxu0 0.0
    %1033 = vmatpush1.msra.mxu0 0.0
    %1034 = vmatprep.subr.mxu0 0.0
    %1035 = vmatpush1.msra.mxu0 0.0
    %1036 = vmatprep.subr.mxu0 0.0
    %1037 = vmatpush1.msra.mxu0 0.0
    %1038 = vmatprep.subr.mxu0 0.0
    %1039 = vmatpush1.msra.mxu0 0.0
    %1040 = vmatprep.subr.mxu0 0.0
    %1041 = vmatpush1.msra.mxu0 0.0
    %1042 = vmatprep.subr.mxu0 0.0
    %1043 = vmatpush1.msra.mxu0 0.0
    %1044 = vmatprep.subr.mxu0 0.0
    %1045 = vmatpush1.msra.mxu0 0.0
    %1046 = vmatprep.subr.mxu0 0.0
    %1047 = vmatpush1.msra.mxu0 0.0
    %1048 = vmatprep.subr.mxu0 0.0
    %1049 = vmatpush1.msra.mxu0 0.0
    %1050 = vmatprep.subr.mxu0 0.0
    %1051 = vmatpush1.msra.mxu0 0.0
    %1052 = vmatprep.subr.mxu0 0.0
    %1053 = vmatpush1.msra.mxu0 0.0
    %1054 = vmatprep.subr.mxu0 0.0
    %1055 = vmatpush1.msra.mxu0 0.0
    %1056 = vmatprep.subr.mxu0 0.0
    %1057 = vmatpush1.msra.mxu0 0.0
    %1058 = vmatprep.mubr.f32.mxu0 0.0
    %v1059 = vand.u32 %v685, 4294901760
    %1060 = vmatmul.mubr.f32.gmra.mrb[0].mxu0 %v1059
    %v1061 = vpop.f32.mrb[0].mxu0
    %v1062 = vadd.f32 %v988, %v1061
    %v1063 = vpop.f32.mrb[0].mxu0
    %1064 = vdwg.mxu0
    %1065 = vmatprep.subr.mxu0 0.0
    %v1066 = vand.u32 %v689, 4294901760
    %1067 = vmatpush1.msra.mxu0 %v1066
    %1068 = vmatprep.subr.mxu0 0.0
    %1069 = vmatpush1.msra.mxu0 0.0
    %1070 = vmatprep.subr.mxu0 0.0
    %1071 = vmatpush1.msra.mxu0 0.0
    %1072 = vmatprep.subr.mxu0 0.0
    %1073 = vmatpush1.msra.mxu0 0.0
    %1074 = vmatprep.subr.mxu0 0.0
    %1075 = vmatpush1.msra.mxu0 0.0
    %1076 = vmatprep.subr.mxu0 0.0
    %1077 = vmatpush1.msra.mxu0 0.0
    %1078 = vmatprep.subr.mxu0 0.0
    %1079 = vmatpush1.msra.mxu0 0.0
    %1080 = vmatprep.subr.mxu0 0.0
    %1081 = vmatpush1.msra.mxu0 0.0
    %1082 = vmatprep.subr.mxu0 0.0
    %1083 = vmatpush1.msra.mxu0 0.0
    %1084 = vmatprep.subr.mxu0 0.0
    %1085 = vmatpush1.msra.mxu0 0.0
    %1086 = vmatprep.subr.mxu0 0.0
    %1087 = vmatpush1.msra.mxu0 0.0
    %1088 = vmatprep.subr.mxu0 0.0
    %1089 = vmatpush1.msra.mxu0 0.0
    %1090 = vmatprep.subr.mxu0 0.0
    %1091 = vmatpush1.msra.mxu0 0.0
    %1092 = vmatprep.subr.mxu0 0.0
    %1093 = vmatpush1.msra.mxu0 0.0
    %1094 = vmatprep.subr.mxu0 0.0
    %1095 = vmatpush1.msra.mxu0 0.0
    %1096 = vmatprep.subr.mxu0 0.0
    %1097 = vmatpush1.msra.mxu0 0.0
    %1098 = vmatprep.subr.mxu0 0.0
    %1099 = vmatpush1.msra.mxu0 0.0
    %1100 = vmatprep.subr.mxu0 0.0
    %1101 = vmatpush1.msra.mxu0 0.0
    %1102 = vmatprep.subr.mxu0 0.0
    %1103 = vmatpush1.msra.mxu0 0.0
    %1104 = vmatprep.subr.mxu0 0.0
    %1105 = vmatpush1.msra.mxu0 0.0
    %1106 = vmatprep.subr.mxu0 0.0
    %1107 = vmatpush1.msra.mxu0 0.0
    %1108 = vmatprep.subr.mxu0 0.0
    %1109 = vmatpush1.msra.mxu0 0.0
    %1110 = vmatprep.subr.mxu0 0.0
    %1111 = vmatpush1.msra.mxu0 0.0
    %1112 = vmatprep.subr.mxu0 0.0
    %1113 = vmatpush1.msra.mxu0 0.0
    %1114 = vmatprep.subr.mxu0 0.0
    %1115 = vmatpush1.msra.mxu0 0.0
    %1116 = vmatprep.subr.mxu0 0.0
    %1117 = vmatpush1.msra.mxu0 0.0
    %1118 = vmatprep.subr.mxu0 0.0
    %1119 = vmatpush1.msra.mxu0 0.0
    %1120 = vmatprep.subr.mxu0 0.0
    %1121 = vmatpush1.msra.mxu0 0.0
    %1122 = vmatprep.subr.mxu0 0.0
    %1123 = vmatpush1.msra.mxu0 0.0
    %1124 = vmatprep.subr.mxu0 0.0
    %1125 = vmatpush1.msra.mxu0 0.0
    %1126 = vmatprep.subr.mxu0 0.0
    %1127 = vmatpush1.msra.mxu0 0.0
    %1128 = vmatprep.subr.mxu0 0.0
    %1129 = vmatpush1.msra.mxu0 0.0
    %1130 = vmatprep.mubr.f32.mxu0 0.0
    %v1131 = vand.u32 %v685, 4294901760
    %1132 = vmatmul.mubr.f32.gmra.mrb[0].mxu0 %v1131
    %v1133 = vpop.f32.mrb[0].mxu0
    %v1134 = vadd.f32 %v1062, %v1133
    %v1135 = vpop.f32.mrb[0].mxu0
    %1136 = vdwg.mxu0
    %v1137 = vsub.f32 %v21, %v1134
    %v1138 = vmul.f32 %v1137, %v1137
    %1139 = vmatprep.subr.mxu0 0.0
    %v1140 = vand.u32 %v24, 4294901760
    %1141 = vmatpush1.msra.mxu0 %v1140
    %1142 = vmatprep.subr.mxu0 0.0
    %v1143 = vand.u32 %v25, 4294901760
    %1144 = vmatpush1.msra.mxu0 %v1143
    %1145 = vmatprep.subr.mxu0 0.0
    %v1146 = vand.u32 %v26, 4294901760
    %1147 = vmatpush1.msra.mxu0 %v1146
    %1148 = vmatprep.subr.mxu0 0.0
    %v1149 = vand.u32 %v27, 4294901760
    %1150 = vmatpush1.msra.mxu0 %v1149
    %1151 = vmatprep.subr.mxu0 0.0
    %v1152 = vand.u32 %v28, 4294901760
    %1153 = vmatpush1.msra.mxu0 %v1152
    %1154 = vmatprep.subr.mxu0 0.0
    %v1155 = vand.u32 %v29, 4294901760
    %1156 = vmatpush1.msra.mxu0 %v1155
    %1157 = vmatprep.subr.mxu0 0.0
    %v1158 = vand.u32 %v30, 4294901760
    %1159 = vmatpush1.msra.mxu0 %v1158
    %1160 = vmatprep.subr.mxu0 0.0
    %v1161 = vand.u32 %v31, 4294901760
    %1162 = vmatpush1.msra.mxu0 %v1161
    %1163 = vmatprep.subr.mxu0 0.0
    %v1164 = vand.u32 %v32, 4294901760
    %1165 = vmatpush1.msra.mxu0 %v1164
    %1166 = vmatprep.subr.mxu0 0.0
    %v1167 = vand.u32 %v33, 4294901760
    %1168 = vmatpush1.msra.mxu0 %v1167
    %1169 = vmatprep.subr.mxu0 0.0
    %v1170 = vand.u32 %v34, 4294901760
    %1171 = vmatpush1.msra.mxu0 %v1170
    %1172 = vmatprep.subr.mxu0 0.0
    %v1173 = vand.u32 %v35, 4294901760
    %1174 = vmatpush1.msra.mxu0 %v1173
    %1175 = vmatprep.subr.mxu0 0.0
    %v1176 = vand.u32 %v36, 4294901760
    %1177 = vmatpush1.msra.mxu0 %v1176
    %1178 = vmatprep.subr.mxu0 0.0
    %v1179 = vand.u32 %v37, 4294901760
    %1180 = vmatpush1.msra.mxu0 %v1179
    %1181 = vmatprep.subr.mxu0 0.0
    %v1182 = vand.u32 %v38, 4294901760
    %1183 = vmatpush1.msra.mxu0 %v1182
    %1184 = vmatprep.subr.mxu0 0.0
    %v1185 = vand.u32 %v39, 4294901760
    %1186 = vmatpush1.msra.mxu0 %v1185
    %1187 = vmatprep.subr.mxu0 0.0
    %1188 = vmatpush1.msra.mxu0 0.0
    %1189 = vmatprep.subr.mxu0 0.0
    %1190 = vmatpush1.msra.mxu0 0.0
    %1191 = vmatprep.subr.mxu0 0.0
    %1192 = vmatpush1.msra.mxu0 0.0
    %1193 = vmatprep.subr.mxu0 0.0
    %1194 = vmatpush1.msra.mxu0 0.0
    %1195 = vmatprep.subr.mxu0 0.0
    %1196 = vmatpush1.msra.mxu0 0.0
    %1197 = vmatprep.subr.mxu0 0.0
    %1198 = vmatpush1.msra.mxu0 0.0
    %1199 = vmatprep.subr.mxu0 0.0
    %1200 = vmatpush1.msra.mxu0 0.0
    %1201 = vmatprep.subr.mxu0 0.0
    %1202 = vmatpush1.msra.mxu0 0.0
    %1203 = vmatprep.subr.mxu0 0.0
    %1204 = vmatpush1.msra.mxu0 0.0
    %1205 = vmatprep.subr.mxu0 0.0
    %1206 = vmatpush1.msra.mxu0 0.0
    %1207 = vmatprep.subr.mxu0 0.0
    %1208 = vmatpush1.msra.mxu0 0.0
    %1209 = vmatprep.subr.mxu0 0.0
    %1210 = vmatpush1.msra.mxu0 0.0
    %1211 = vmatprep.subr.mxu0 0.0
    %1212 = vmatpush1.msra.mxu0 0.0
    %1213 = vmatprep.subr.mxu0 0.0
    %1214 = vmatpush1.msra.mxu0 0.0
    %1215 = vmatprep.subr.mxu0 0.0
    %1216 = vmatpush1.msra.mxu0 0.0
    %1217 = vmatprep.subr.mxu0 0.0
    %1218 = vmatpush1.msra.mxu0 0.0
    %1219 = vmatprep.mubr.f32.mxu0 0.0
    %v1220 = vand.u32 %v1138, 4294901760
    %v1221 = vsub.f32 %v1138, %v1220
    %v1222 = vand.u32 %v1221, 4294901760
    %v1223 = vsub.f32 %v1221, %v1222
    %v1224 = vand.u32 %v1223, 4294901760
    %1225 = vmatmul.mubr.f32.gmra.mrb[0].mxu0 %v1224
    %v1226 = vpop.f32.mrb[0].mxu0
    %v1227 = vadd.f32 0.0, %v1226
    %v1228 = vpop.f32.mrb[0].mxu0
    %1229 = vdwg.mxu0
    %1230 = vmatprep.subr.mxu0 0.0
    %v1231 = vand.u32 %v24, 4294901760
    %v1232 = vsub.f32 %v24, %v1231
    %v1233 = vand.u32 %v1232, 4294901760
    %v1234 = vsub.f32 %v1232, %v1233
    %v1235 = vand.u32 %v1234, 4294901760
    %1236 = vmatpush1.msra.mxu0 %v1235
    %1237 = vmatprep.subr.mxu0 0.0
    %v1238 = vand.u32 %v25, 4294901760
    %v1239 = vsub.f32 %v25, %v1238
    %v1240 = vand.u32 %v1239, 4294901760
    %v1241 = vsub.f32 %v1239, %v1240
    %v1242 = vand.u32 %v1241, 4294901760
    %1243 = vmatpush1.msra.mxu0 %v1242
    %1244 = vmatprep.subr.mxu0 0.0
    %v1245 = vand.u32 %v26, 4294901760
    %v1246 = vsub.f32 %v26, %v1245
    %v1247 = vand.u32 %v1246, 4294901760
    %v1248 = vsub.f32 %v1246, %v1247
    %v1249 = vand.u32 %v1248, 4294901760
    %1250 = vmatpush1.msra.mxu0 %v1249
    %1251 = vmatprep.subr.mxu0 0.0
    %v1252 = vand.u32 %v27, 4294901760
    %v1253 = vsub.f32 %v27, %v1252
    %v1254 = vand.u32 %v1253, 4294901760
    %v1255 = vsub.f32 %v1253, %v1254
    %v1256 = vand.u32 %v1255, 4294901760
    %1257 = vmatpush1.msra.mxu0 %v1256
    %1258 = vmatprep.subr.mxu0 0.0
    %v1259 = vand.u32 %v28, 4294901760
    %v1260 = vsub.f32 %v28, %v1259
    %v1261 = vand.u32 %v1260, 4294901760
    %v1262 = vsub.f32 %v1260, %v1261
    %v1263 = vand.u32 %v1262, 4294901760
    %1264 = vmatpush1.msra.mxu0 %v1263
    %1265 = vmatprep.subr.mxu0 0.0
    %v1266 = vand.u32 %v29, 4294901760
    %v1267 = vsub.f32 %v29, %v1266
    %v1268 = vand.u32 %v1267, 4294901760
    %v1269 = vsub.f32 %v1267, %v1268
    %v1270 = vand.u32 %v1269, 4294901760
    %1271 = vmatpush1.msra.mxu0 %v1270
    %1272 = vmatprep.subr.mxu0 0.0
    %v1273 = vand.u32 %v30, 4294901760
    %v1274 = vsub.f32 %v30, %v1273
    %v1275 = vand.u32 %v1274, 4294901760
    %v1276 = vsub.f32 %v1274, %v1275
    %v1277 = vand.u32 %v1276, 4294901760
    %1278 = vmatpush1.msra.mxu0 %v1277
    %1279 = vmatprep.subr.mxu0 0.0
    %v1280 = vand.u32 %v31, 4294901760
    %v1281 = vsub.f32 %v31, %v1280
    %v1282 = vand.u32 %v1281, 4294901760
    %v1283 = vsub.f32 %v1281, %v1282
    %v1284 = vand.u32 %v1283, 4294901760
    %1285 = vmatpush1.msra.mxu0 %v1284
    %1286 = vmatprep.subr.mxu0 0.0
    %v1287 = vand.u32 %v32, 4294901760
    %v1288 = vsub.f32 %v32, %v1287
    %v1289 = vand.u32 %v1288, 4294901760
    %v1290 = vsub.f32 %v1288, %v1289
    %v1291 = vand.u32 %v1290, 4294901760
    %1292 = vmatpush1.msra.mxu0 %v1291
    %1293 = vmatprep.subr.mxu0 0.0
    %v1294 = vand.u32 %v33, 4294901760
    %v1295 = vsub.f32 %v33, %v1294
    %v1296 = vand.u32 %v1295, 4294901760
    %v1297 = vsub.f32 %v1295, %v1296
    %v1298 = vand.u32 %v1297, 4294901760
    %1299 = vmatpush1.msra.mxu0 %v1298
    %1300 = vmatprep.subr.mxu0 0.0
    %v1301 = vand.u32 %v34, 4294901760
    %v1302 = vsub.f32 %v34, %v1301
    %v1303 = vand.u32 %v1302, 4294901760
    %v1304 = vsub.f32 %v1302, %v1303
    %v1305 = vand.u32 %v1304, 4294901760
    %1306 = vmatpush1.msra.mxu0 %v1305
    %1307 = vmatprep.subr.mxu0 0.0
    %v1308 = vand.u32 %v35, 4294901760
    %v1309 = vsub.f32 %v35, %v1308
    %v1310 = vand.u32 %v1309, 4294901760
    %v1311 = vsub.f32 %v1309, %v1310
    %v1312 = vand.u32 %v1311, 4294901760
    %1313 = vmatpush1.msra.mxu0 %v1312
    %1314 = vmatprep.subr.mxu0 0.0
    %v1315 = vand.u32 %v36, 4294901760
    %v1316 = vsub.f32 %v36, %v1315
    %v1317 = vand.u32 %v1316, 4294901760
    %v1318 = vsub.f32 %v1316, %v1317
    %v1319 = vand.u32 %v1318, 4294901760
    %1320 = vmatpush1.msra.mxu0 %v1319
    %1321 = vmatprep.subr.mxu0 0.0
    %v1322 = vand.u32 %v37, 4294901760
    %v1323 = vsub.f32 %v37, %v1322
    %v1324 = vand.u32 %v1323, 4294901760
    %v1325 = vsub.f32 %v1323, %v1324
    %v1326 = vand.u32 %v1325, 4294901760
    %1327 = vmatpush1.msra.mxu0 %v1326
    %1328 = vmatprep.subr.mxu0 0.0
    %v1329 = vand.u32 %v38, 4294901760
    %v1330 = vsub.f32 %v38, %v1329
    %v1331 = vand.u32 %v1330, 4294901760
    %v1332 = vsub.f32 %v1330, %v1331
    %v1333 = vand.u32 %v1332, 4294901760
    %1334 = vmatpush1.msra.mxu0 %v1333
    %1335 = vmatprep.subr.mxu0 0.0
    %v1336 = vand.u32 %v39, 4294901760
    %v1337 = vsub.f32 %v39, %v1336
    %v1338 = vand.u32 %v1337, 4294901760
    %v1339 = vsub.f32 %v1337, %v1338
    %v1340 = vand.u32 %v1339, 4294901760
    %1341 = vmatpush1.msra.mxu0 %v1340
    %1342 = vmatprep.subr.mxu0 0.0
    %1343 = vmatpush1.msra.mxu0 0.0
    %1344 = vmatprep.subr.mxu0 0.0
    %1345 = vmatpush1.msra.mxu0 0.0
    %1346 = vmatprep.subr.mxu0 0.0
    %1347 = vmatpush1.msra.mxu0 0.0
    %1348 = vmatprep.subr.mxu0 0.0
    %1349 = vmatpush1.msra.mxu0 0.0
    %1350 = vmatprep.subr.mxu0 0.0
    %1351 = vmatpush1.msra.mxu0 0.0
    %1352 = vmatprep.subr.mxu0 0.0
    %1353 = vmatpush1.msra.mxu0 0.0
    %1354 = vmatprep.subr.mxu0 0.0
    %1355 = vmatpush1.msra.mxu0 0.0
    %1356 = vmatprep.subr.mxu0 0.0
    %1357 = vmatpush1.msra.mxu0 0.0
    %1358 = vmatprep.subr.mxu0 0.0
    %1359 = vmatpush1.msra.mxu0 0.0
    %1360 = vmatprep.subr.mxu0 0.0
    %1361 = vmatpush1.msra.mxu0 0.0
    %1362 = vmatprep.subr.mxu0 0.0
    %1363 = vmatpush1.msra.mxu0 0.0
    %1364 = vmatprep.subr.mxu0 0.0
    %1365 = vmatpush1.msra.mxu0 0.0
    %1366 = vmatprep.subr.mxu0 0.0
    %1367 = vmatpush1.msra.mxu0 0.0
    %1368 = vmatprep.subr.mxu0 0.0
    %1369 = vmatpush1.msra.mxu0 0.0
    %1370 = vmatprep.subr.mxu0 0.0
    %1371 = vmatpush1.msra.mxu0 0.0
    %1372 = vmatprep.subr.mxu0 0.0
    %1373 = vmatpush1.msra.mxu0 0.0
    %1374 = vmatprep.mubr.f32.mxu0 0.0
    %v1375 = vand.u32 %v1138, 4294901760
    %1376 = vmatmul.mubr.f32.gmra.mrb[0].mxu0 %v1375
    %v1377 = vpop.f32.mrb[0].mxu0
    %v1378 = vadd.f32 %v1227, %v1377
    %v1379 = vpop.f32.mrb[0].mxu0
    %1380 = vdwg.mxu0
    %1381 = vmatprep.subr.mxu0 0.0
    %v1382 = vand.u32 %v24, 4294901760
    %v1383 = vsub.f32 %v24, %v1382
    %1384 = vmatpush1.msra.mxu0 %v1383
    %1385 = vmatprep.subr.mxu0 0.0
    %v1386 = vand.u32 %v25, 4294901760
    %v1387 = vsub.f32 %v25, %v1386
    %1388 = vmatpush1.msra.mxu0 %v1387
    %1389 = vmatprep.subr.mxu0 0.0
    %v1390 = vand.u32 %v26, 4294901760
    %v1391 = vsub.f32 %v26, %v1390
    %1392 = vmatpush1.msra.mxu0 %v1391
    %1393 = vmatprep.subr.mxu0 0.0
    %v1394 = vand.u32 %v27, 4294901760
    %v1395 = vsub.f32 %v27, %v1394
    %1396 = vmatpush1.msra.mxu0 %v1395
    %1397 = vmatprep.subr.mxu0 0.0
    %v1398 = vand.u32 %v28, 4294901760
    %v1399 = vsub.f32 %v28, %v1398
    %1400 = vmatpush1.msra.mxu0 %v1399
    %1401 = vmatprep.subr.mxu0 0.0
    %v1402 = vand.u32 %v29, 4294901760
    %v1403 = vsub.f32 %v29, %v1402
    %1404 = vmatpush1.msra.mxu0 %v1403
    %1405 = vmatprep.subr.mxu0 0.0
    %v1406 = vand.u32 %v30, 4294901760
    %v1407 = vsub.f32 %v30, %v1406
    %1408 = vmatpush1.msra.mxu0 %v1407
    %1409 = vmatprep.subr.mxu0 0.0
    %v1410 = vand.u32 %v31, 4294901760
    %v1411 = vsub.f32 %v31, %v1410
    %1412 = vmatpush1.msra.mxu0 %v1411
    %1413 = vmatprep.subr.mxu0 0.0
    %v1414 = vand.u32 %v32, 4294901760
    %v1415 = vsub.f32 %v32, %v1414
    %1416 = vmatpush1.msra.mxu0 %v1415
    %1417 = vmatprep.subr.mxu0 0.0
    %v1418 = vand.u32 %v33, 4294901760
    %v1419 = vsub.f32 %v33, %v1418
    %1420 = vmatpush1.msra.mxu0 %v1419
    %1421 = vmatprep.subr.mxu0 0.0
    %v1422 = vand.u32 %v34, 4294901760
    %v1423 = vsub.f32 %v34, %v1422
    %1424 = vmatpush1.msra.mxu0 %v1423
    %1425 = vmatprep.subr.mxu0 0.0
    %v1426 = vand.u32 %v35, 4294901760
    %v1427 = vsub.f32 %v35, %v1426
    %1428 = vmatpush1.msra.mxu0 %v1427
    %1429 = vmatprep.subr.mxu0 0.0
    %v1430 = vand.u32 %v36, 4294901760
    %v1431 = vsub.f32 %v36, %v1430
    %1432 = vmatpush1.msra.mxu0 %v1431
    %1433 = vmatprep.subr.mxu0 0.0
    %v1434 = vand.u32 %v37, 4294901760
    %v1435 = vsub.f32 %v37, %v1434
    %1436 = vmatpush1.msra.mxu0 %v1435
    %1437 = vmatprep.subr.mxu0 0.0
    %v1438 = vand.u32 %v38, 4294901760
    %v1439 = vsub.f32 %v38, %v1438
    %1440 = vmatpush1.msra.mxu0 %v1439
    %1441 = vmatprep.subr.mxu0 0.0
    %v1442 = vand.u32 %v39, 4294901760
    %v1443 = vsub.f32 %v39, %v1442
    %1444 = vmatpush1.msra.mxu0 %v1443
    %1445 = vmatprep.subr.mxu0 0.0
    %1446 = vmatpush1.msra.mxu0 0.0
    %1447 = vmatprep.subr.mxu0 0.0
    %1448 = vmatpush1.msra.mxu0 0.0
    %1449 = vmatprep.subr.mxu0 0.0
    %1450 = vmatpush1.msra.mxu0 0.0
    %1451 = vmatprep.subr.mxu0 0.0
    %1452 = vmatpush1.msra.mxu0 0.0
    %1453 = vmatprep.subr.mxu0 0.0
    %1454 = vmatpush1.msra.mxu0 0.0
    %1455 = vmatprep.subr.mxu0 0.0
    %1456 = vmatpush1.msra.mxu0 0.0
    %1457 = vmatprep.subr.mxu0 0.0
    %1458 = vmatpush1.msra.mxu0 0.0
    %1459 = vmatprep.subr.mxu0 0.0
    %1460 = vmatpush1.msra.mxu0 0.0
    %1461 = vmatprep.subr.mxu0 0.0
    %1462 = vmatpush1.msra.mxu0 0.0
    %1463 = vmatprep.subr.mxu0 0.0
    %1464 = vmatpush1.msra.mxu0 0.0
    %1465 = vmatprep.subr.mxu0 0.0
    %1466 = vmatpush1.msra.mxu0 0.0
    %1467 = vmatprep.subr.mxu0 0.0
    %1468 = vmatpush1.msra.mxu0 0.0
    %1469 = vmatprep.subr.mxu0 0.0
    %1470 = vmatpush1.msra.mxu0 0.0
    %1471 = vmatprep.subr.mxu0 0.0
    %1472 = vmatpush1.msra.mxu0 0.0
    %1473 = vmatprep.subr.mxu0 0.0
    %1474 = vmatpush1.msra.mxu0 0.0
    %1475 = vmatprep.subr.mxu0 0.0
    %1476 = vmatpush1.msra.mxu0 0.0
    %1477 = vmatprep.mubr.f32.mxu0 0.0
    %v1478 = vand.u32 %v1138, 4294901760
    %v1479 = vsub.f32 %v1138, %v1478
    %1480 = vmatmul.mubr.f32.gmra.mrb[0].mxu0 %v1479
    %v1481 = vpop.f32.mrb[0].mxu0
    %v1482 = vadd.f32 %v1378, %v1481
    %v1483 = vpop.f32.mrb[0].mxu0
    %1484 = vdwg.mxu0
    %1485 = vmatprep.subr.mxu0 0.0
    %v1486 = vand.u32 %v24, 4294901760
    %1487 = vmatpush1.msra.mxu0 %v1486
    %1488 = vmatprep.subr.mxu0 0.0
    %v1489 = vand.u32 %v25, 4294901760
    %1490 = vmatpush1.msra.mxu0 %v1489
    %1491 = vmatprep.subr.mxu0 0.0
    %v1492 = vand.u32 %v26, 4294901760
    %1493 = vmatpush1.msra.mxu0 %v1492
    %1494 = vmatprep.subr.mxu0 0.0
    %v1495 = vand.u32 %v27, 4294901760
    %1496 = vmatpush1.msra.mxu0 %v1495
    %1497 = vmatprep.subr.mxu0 0.0
    %v1498 = vand.u32 %v28, 4294901760
    %1499 = vmatpush1.msra.mxu0 %v1498
    %1500 = vmatprep.subr.mxu0 0.0
    %v1501 = vand.u32 %v29, 4294901760
    %1502 = vmatpush1.msra.mxu0 %v1501
    %1503 = vmatprep.subr.mxu0 0.0
    %v1504 = vand.u32 %v30, 4294901760
    %1505 = vmatpush1.msra.mxu0 %v1504
    %1506 = vmatprep.subr.mxu0 0.0
    %v1507 = vand.u32 %v31, 4294901760
    %1508 = vmatpush1.msra.mxu0 %v1507
    %1509 = vmatprep.subr.mxu0 0.0
    %v1510 = vand.u32 %v32, 4294901760
    %1511 = vmatpush1.msra.mxu0 %v1510
    %1512 = vmatprep.subr.mxu0 0.0
    %v1513 = vand.u32 %v33, 4294901760
    %1514 = vmatpush1.msra.mxu0 %v1513
    %1515 = vmatprep.subr.mxu0 0.0
    %v1516 = vand.u32 %v34, 4294901760
    %1517 = vmatpush1.msra.mxu0 %v1516
    %1518 = vmatprep.subr.mxu0 0.0
    %v1519 = vand.u32 %v35, 4294901760
    %1520 = vmatpush1.msra.mxu0 %v1519
    %1521 = vmatprep.subr.mxu0 0.0
    %v1522 = vand.u32 %v36, 4294901760
    %1523 = vmatpush1.msra.mxu0 %v1522
    %1524 = vmatprep.subr.mxu0 0.0
    %v1525 = vand.u32 %v37, 4294901760
    %1526 = vmatpush1.msra.mxu0 %v1525
    %1527 = vmatprep.subr.mxu0 0.0
    %v1528 = vand.u32 %v38, 4294901760
    %1529 = vmatpush1.msra.mxu0 %v1528
    %1530 = vmatprep.subr.mxu0 0.0
    %v1531 = vand.u32 %v39, 4294901760
    %1532 = vmatpush1.msra.mxu0 %v1531
    %1533 = vmatprep.subr.mxu0 0.0
    %1534 = vmatpush1.msra.mxu0 0.0
    %1535 = vmatprep.subr.mxu0 0.0
    %1536 = vmatpush1.msra.mxu0 0.0
    %1537 = vmatprep.subr.mxu0 0.0
    %1538 = vmatpush1.msra.mxu0 0.0
    %1539 = vmatprep.subr.mxu0 0.0
    %1540 = vmatpush1.msra.mxu0 0.0
    %1541 = vmatprep.subr.mxu0 0.0
    %1542 = vmatpush1.msra.mxu0 0.0
    %1543 = vmatprep.subr.mxu0 0.0
    %1544 = vmatpush1.msra.mxu0 0.0
    %1545 = vmatprep.subr.mxu0 0.0
    %1546 = vmatpush1.msra.mxu0 0.0
    %1547 = vmatprep.subr.mxu0 0.0
    %1548 = vmatpush1.msra.mxu0 0.0
    %1549 = vmatprep.subr.mxu0 0.0
    %1550 = vmatpush1.msra.mxu0 0.0
    %1551 = vmatprep.subr.mxu0 0.0
    %1552 = vmatpush1.msra.mxu0 0.0
    %1553 = vmatprep.subr.mxu0 0.0
    %1554 = vmatpush1.msra.mxu0 0.0
    %1555 = vmatprep.subr.mxu0 0.0
    %1556 = vmatpush1.msra.mxu0 0.0
    %1557 = vmatprep.subr.mxu0 0.0
    %1558 = vmatpush1.msra.mxu0 0.0
    %1559 = vmatprep.subr.mxu0 0.0
    %1560 = vmatpush1.msra.mxu0 0.0
    %1561 = vmatprep.subr.mxu0 0.0
    %1562 = vmatpush1.msra.mxu0 0.0
    %1563 = vmatprep.subr.mxu0 0.0
    %1564 = vmatpush1.msra.mxu0 0.0
    %1565 = vmatprep.mubr.f32.mxu0 0.0
    %v1566 = vand.u32 %v1138, 4294901760
    %v1567 = vsub.f32 %v1138, %v1566
    %v1568 = vand.u32 %v1567, 4294901760
    %1569 = vmatmul.mubr.f32.gmra.mrb[0].mxu0 %v1568
    %v1570 = vpop.f32.mrb[0].mxu0
    %v1571 = vadd.f32 %v1482, %v1570
    %v1572 = vpop.f32.mrb[0].mxu0
    %1573 = vdwg.mxu0
    %1574 = vmatprep.subr.mxu0 0.0
    %v1575 = vand.u32 %v24, 4294901760
    %v1576 = vsub.f32 %v24, %v1575
    %v1577 = vand.u32 %v1576, 4294901760
    %1578 = vmatpush1.msra.mxu0 %v1577
    %1579 = vmatprep.subr.mxu0 0.0
    %v1580 = vand.u32 %v25, 4294901760
    %v1581 = vsub.f32 %v25, %v1580
    %v1582 = vand.u32 %v1581, 4294901760
    %1583 = vmatpush1.msra.mxu0 %v1582
    %1584 = vmatprep.subr.mxu0 0.0
    %v1585 = vand.u32 %v26, 4294901760
    %v1586 = vsub.f32 %v26, %v1585
    %v1587 = vand.u32 %v1586, 4294901760
    %1588 = vmatpush1.msra.mxu0 %v1587
    %1589 = vmatprep.subr.mxu0 0.0
    %v1590 = vand.u32 %v27, 4294901760
    %v1591 = vsub.f32 %v27, %v1590
    %v1592 = vand.u32 %v1591, 4294901760
    %1593 = vmatpush1.msra.mxu0 %v1592
    %1594 = vmatprep.subr.mxu0 0.0
    %v1595 = vand.u32 %v28, 4294901760
    %v1596 = vsub.f32 %v28, %v1595
    %v1597 = vand.u32 %v1596, 4294901760
    %1598 = vmatpush1.msra.mxu0 %v1597
    %1599 = vmatprep.subr.mxu0 0.0
    %v1600 = vand.u32 %v29, 4294901760
    %v1601 = vsub.f32 %v29, %v1600
    %v1602 = vand.u32 %v1601, 4294901760
    %1603 = vmatpush1.msra.mxu0 %v1602
    %1604 = vmatprep.subr.mxu0 0.0
    %v1605 = vand.u32 %v30, 4294901760
    %v1606 = vsub.f32 %v30, %v1605
    %v1607 = vand.u32 %v1606, 4294901760
    %1608 = vmatpush1.msra.mxu0 %v1607
    %1609 = vmatprep.subr.mxu0 0.0
    %v1610 = vand.u32 %v31, 4294901760
    %v1611 = vsub.f32 %v31, %v1610
    %v1612 = vand.u32 %v1611, 4294901760
    %1613 = vmatpush1.msra.mxu0 %v1612
    %1614 = vmatprep.subr.mxu0 0.0
    %v1615 = vand.u32 %v32, 4294901760
    %v1616 = vsub.f32 %v32, %v1615
    %v1617 = vand.u32 %v1616, 4294901760
    %1618 = vmatpush1.msra.mxu0 %v1617
    %1619 = vmatprep.subr.mxu0 0.0
    %v1620 = vand.u32 %v33, 4294901760
    %v1621 = vsub.f32 %v33, %v1620
    %v1622 = vand.u32 %v1621, 4294901760
    %1623 = vmatpush1.msra.mxu0 %v1622
    %1624 = vmatprep.subr.mxu0 0.0
    %v1625 = vand.u32 %v34, 4294901760
    %v1626 = vsub.f32 %v34, %v1625
    %v1627 = vand.u32 %v1626, 4294901760
    %1628 = vmatpush1.msra.mxu0 %v1627
    %1629 = vmatprep.subr.mxu0 0.0
    %v1630 = vand.u32 %v35, 4294901760
    %v1631 = vsub.f32 %v35, %v1630
    %v1632 = vand.u32 %v1631, 4294901760
    %1633 = vmatpush1.msra.mxu0 %v1632
    %1634 = vmatprep.subr.mxu0 0.0
    %v1635 = vand.u32 %v36, 4294901760
    %v1636 = vsub.f32 %v36, %v1635
    %v1637 = vand.u32 %v1636, 4294901760
    %1638 = vmatpush1.msra.mxu0 %v1637
    %1639 = vmatprep.subr.mxu0 0.0
    %v1640 = vand.u32 %v37, 4294901760
    %v1641 = vsub.f32 %v37, %v1640
    %v1642 = vand.u32 %v1641, 4294901760
    %1643 = vmatpush1.msra.mxu0 %v1642
    %1644 = vmatprep.subr.mxu0 0.0
    %v1645 = vand.u32 %v38, 4294901760
    %v1646 = vsub.f32 %v38, %v1645
    %v1647 = vand.u32 %v1646, 4294901760
    %1648 = vmatpush1.msra.mxu0 %v1647
    %1649 = vmatprep.subr.mxu0 0.0
    %v1650 = vand.u32 %v39, 4294901760
    %v1651 = vsub.f32 %v39, %v1650
    %v1652 = vand.u32 %v1651, 4294901760
    %1653 = vmatpush1.msra.mxu0 %v1652
    %1654 = vmatprep.subr.mxu0 0.0
    %1655 = vmatpush1.msra.mxu0 0.0
    %1656 = vmatprep.subr.mxu0 0.0
    %1657 = vmatpush1.msra.mxu0 0.0
    %1658 = vmatprep.subr.mxu0 0.0
    %1659 = vmatpush1.msra.mxu0 0.0
    %1660 = vmatprep.subr.mxu0 0.0
    %1661 = vmatpush1.msra.mxu0 0.0
    %1662 = vmatprep.subr.mxu0 0.0
    %1663 = vmatpush1.msra.mxu0 0.0
    %1664 = vmatprep.subr.mxu0 0.0
    %1665 = vmatpush1.msra.mxu0 0.0
    %1666 = vmatprep.subr.mxu0 0.0
    %1667 = vmatpush1.msra.mxu0 0.0
    %1668 = vmatprep.subr.mxu0 0.0
    %1669 = vmatpush1.msra.mxu0 0.0
    %1670 = vmatprep.subr.mxu0 0.0
    %1671 = vmatpush1.msra.mxu0 0.0
    %1672 = vmatprep.subr.mxu0 0.0
    %1673 = vmatpush1.msra.mxu0 0.0
    %1674 = vmatprep.subr.mxu0 0.0
    %1675 = vmatpush1.msra.mxu0 0.0
    %1676 = vmatprep.subr.mxu0 0.0
    %1677 = vmatpush1.msra.mxu0 0.0
    %1678 = vmatprep.subr.mxu0 0.0
    %1679 = vmatpush1.msra.mxu0 0.0
    %1680 = vmatprep.subr.mxu0 0.0
    %1681 = vmatpush1.msra.mxu0 0.0
    %1682 = vmatprep.subr.mxu0 0.0
    %1683 = vmatpush1.msra.mxu0 0.0
    %1684 = vmatprep.subr.mxu0 0.0
    %1685 = vmatpush1.msra.mxu0 0.0
    %1686 = vmatprep.mubr.f32.mxu0 0.0
    %v1687 = vand.u32 %v1138, 4294901760
    %1688 = vmatmul.mubr.f32.gmra.mrb[0].mxu0 %v1687
    %v1689 = vpop.f32.mrb[0].mxu0
    %v1690 = vadd.f32 %v1571, %v1689
    %v1691 = vpop.f32.mrb[0].mxu0
    %1692 = vdwg.mxu0
    %1693 = vmatprep.subr.mxu0 0.0
    %v1694 = vand.u32 %v24, 4294901760
    %1695 = vmatpush1.msra.mxu0 %v1694
    %1696 = vmatprep.subr.mxu0 0.0
    %v1697 = vand.u32 %v25, 4294901760
    %1698 = vmatpush1.msra.mxu0 %v1697
    %1699 = vmatprep.subr.mxu0 0.0
    %v1700 = vand.u32 %v26, 4294901760
    %1701 = vmatpush1.msra.mxu0 %v1700
    %1702 = vmatprep.subr.mxu0 0.0
    %v1703 = vand.u32 %v27, 4294901760
    %1704 = vmatpush1.msra.mxu0 %v1703
    %1705 = vmatprep.subr.mxu0 0.0
    %v1706 = vand.u32 %v28, 4294901760
    %1707 = vmatpush1.msra.mxu0 %v1706
    %1708 = vmatprep.subr.mxu0 0.0
    %v1709 = vand.u32 %v29, 4294901760
    %1710 = vmatpush1.msra.mxu0 %v1709
    %1711 = vmatprep.subr.mxu0 0.0
    %v1712 = vand.u32 %v30, 4294901760
    %1713 = vmatpush1.msra.mxu0 %v1712
    %1714 = vmatprep.subr.mxu0 0.0
    %v1715 = vand.u32 %v31, 4294901760
    %1716 = vmatpush1.msra.mxu0 %v1715
    %1717 = vmatprep.subr.mxu0 0.0
    %v1718 = vand.u32 %v32, 4294901760
    %1719 = vmatpush1.msra.mxu0 %v1718
    %1720 = vmatprep.subr.mxu0 0.0
    %v1721 = vand.u32 %v33, 4294901760
    %1722 = vmatpush1.msra.mxu0 %v1721
    %1723 = vmatprep.subr.mxu0 0.0
    %v1724 = vand.u32 %v34, 4294901760
    %1725 = vmatpush1.msra.mxu0 %v1724
    %1726 = vmatprep.subr.mxu0 0.0
    %v1727 = vand.u32 %v35, 4294901760
    %1728 = vmatpush1.msra.mxu0 %v1727
    %1729 = vmatprep.subr.mxu0 0.0
    %v1730 = vand.u32 %v36, 4294901760
    %1731 = vmatpush1.msra.mxu0 %v1730
    %1732 = vmatprep.subr.mxu0 0.0
    %v1733 = vand.u32 %v37, 4294901760
    %1734 = vmatpush1.msra.mxu0 %v1733
    %1735 = vmatprep.subr.mxu0 0.0
    %v1736 = vand.u32 %v38, 4294901760
    %1737 = vmatpush1.msra.mxu0 %v1736
    %1738 = vmatprep.subr.mxu0 0.0
    %v1739 = vand.u32 %v39, 4294901760
    %1740 = vmatpush1.msra.mxu0 %v1739
    %1741 = vmatprep.subr.mxu0 0.0
    %1742 = vmatpush1.msra.mxu0 0.0
    %1743 = vmatprep.subr.mxu0 0.0
    %1744 = vmatpush1.msra.mxu0 0.0
    %1745 = vmatprep.subr.mxu0 0.0
    %1746 = vmatpush1.msra.mxu0 0.0
    %1747 = vmatprep.subr.mxu0 0.0
    %1748 = vmatpush1.msra.mxu0 0.0
    %1749 = vmatprep.subr.mxu0 0.0
    %1750 = vmatpush1.msra.mxu0 0.0
    %1751 = vmatprep.subr.mxu0 0.0
    %1752 = vmatpush1.msra.mxu0 0.0
    %1753 = vmatprep.subr.mxu0 0.0
    %1754 = vmatpush1.msra.mxu0 0.0
    %1755 = vmatprep.subr.mxu0 0.0
    %1756 = vmatpush1.msra.mxu0 0.0
    %1757 = vmatprep.subr.mxu0 0.0
    %1758 = vmatpush1.msra.mxu0 0.0
    %1759 = vmatprep.subr.mxu0 0.0
    %1760 = vmatpush1.msra.mxu0 0.0
    %1761 = vmatprep.subr.mxu0 0.0
    %1762 = vmatpush1.msra.mxu0 0.0
    %1763 = vmatprep.subr.mxu0 0.0
    %1764 = vmatpush1.msra.mxu0 0.0
    %1765 = vmatprep.subr.mxu0 0.0
    %1766 = vmatpush1.msra.mxu0 0.0
    %1767 = vmatprep.subr.mxu0 0.0
    %1768 = vmatpush1.msra.mxu0 0.0
    %1769 = vmatprep.subr.mxu0 0.0
    %1770 = vmatpush1.msra.mxu0 0.0
    %1771 = vmatprep.subr.mxu0 0.0
    %1772 = vmatpush1.msra.mxu0 0.0
    %1773 = vmatprep.mubr.f32.mxu0 0.0
    %v1774 = vand.u32 %v1138, 4294901760
    %1775 = vmatmul.mubr.f32.gmra.mrb[0].mxu0 %v1774
    %v1776 = vpop.f32.mrb[0].mxu0
    %v1777 = vadd.f32 %v1690, %v1776
    %v1778 = vpop.f32.mrb[0].mxu0
    %1779 = vdwg.mxu0
    %v1780 = vmul.f32 %v1777, 0.03125
    %v1781 = vrsqrt.pop %v1780
    %v1782 = vmul.f32 %v1780, %v1781
    %vm1783 = vcmp.eq.f32.partialorder %v1780, inf
    %v1784 = vsel %vm1783, %v1780, %v1782
    %vm1785 = vcmp.eq.f32.partialorder %v1780, 0.0
    %v1786 = vand.u32 %v1780, 2147483648
    %v1787 = vsel %vm1785, %v1786, %v1784
    %v1788 = vadd.f32 %v1787, 1e-05
    %v1789 = vrcp.pop %v1788
    %v1791 = vsel %vm683, %v1789, 0
    %1793 = vmatprep.subr.mxu0 0.0
    %v1794 = vand.u32 %v689, 4294901760
    %1795 = vmatpush1.msra.mxu0 %v1794
    %1796 = vmatprep.subr.mxu0 0.0
    %1797 = vmatpush1.msra.mxu0 0.0
    %1798 = vmatprep.subr.mxu0 0.0
    %1799 = vmatpush1.msra.mxu0 0.0
    %1800 = vmatprep.subr.mxu0 0.0
    %1801 = vmatpush1.msra.mxu0 0.0
    %1802 = vmatprep.subr.mxu0 0.0
    %1803 = vmatpush1.msra.mxu0 0.0
    %1804 = vmatprep.subr.mxu0 0.0
    %1805 = vmatpush1.msra.mxu0 0.0
    %1806 = vmatprep.subr.mxu0 0.0
    %1807 = vmatpush1.msra.mxu0 0.0
    %1808 = vmatprep.subr.mxu0 0.0
    %1809 = vmatpush1.msra.mxu0 0.0
    %1810 = vmatprep.subr.mxu0 0.0
    %1811 = vmatpush1.msra.mxu0 0.0
    %1812 = vmatprep.subr.mxu0 0.0
    %1813 = vmatpush1.msra.mxu0 0.0
    %1814 = vmatprep.subr.mxu0 0.0
    %1815 = vmatpush1.msra.mxu0 0.0
    %1816 = vmatprep.subr.mxu0 0.0
    %1817 = vmatpush1.msra.mxu0 0.0
    %1818 = vmatprep.subr.mxu0 0.0
    %1819 = vmatpush1.msra.mxu0 0.0
    %1820 = vmatprep.subr.mxu0 0.0
    %1821 = vmatpush1.msra.mxu0 0.0
    %1822 = vmatprep.subr.mxu0 0.0
    %1823 = vmatpush1.msra.mxu0 0.0
    %1824 = vmatprep.subr.mxu0 0.0
    %1825 = vmatpush1.msra.mxu0 0.0
    %1826 = vmatprep.subr.mxu0 0.0
    %1827 = vmatpush1.msra.mxu0 0.0
    %1828 = vmatprep.subr.mxu0 0.0
    %1829 = vmatpush1.msra.mxu0 0.0
    %1830 = vmatprep.subr.mxu0 0.0
    %1831 = vmatpush1.msra.mxu0 0.0
    %1832 = vmatprep.subr.mxu0 0.0
    %1833 = vmatpush1.msra.mxu0 0.0
    %1834 = vmatprep.subr.mxu0 0.0
    %1835 = vmatpush1.msra.mxu0 0.0
    %1836 = vmatprep.subr.mxu0 0.0
    %1837 = vmatpush1.msra.mxu0 0.0
    %1838 = vmatprep.subr.mxu0 0.0
    %1839 = vmatpush1.msra.mxu0 0.0
    %1840 = vmatprep.subr.mxu0 0.0
    %1841 = vmatpush1.msra.mxu0 0.0
    %1842 = vmatprep.subr.mxu0 0.0
    %1843 = vmatpush1.msra.mxu0 0.0
    %1844 = vmatprep.subr.mxu0 0.0
    %1845 = vmatpush1.msra.mxu0 0.0
    %1846 = vmatprep.subr.mxu0 0.0
    %1847 = vmatpush1.msra.mxu0 0.0
    %1848 = vmatprep.subr.mxu0 0.0
    %1849 = vmatpush1.msra.mxu0 0.0
    %1850 = vmatprep.subr.mxu0 0.0
    %1851 = vmatpush1.msra.mxu0 0.0
    %1852 = vmatprep.subr.mxu0 0.0
    %1853 = vmatpush1.msra.mxu0 0.0
    %1854 = vmatprep.subr.mxu0 0.0
    %1855 = vmatpush1.msra.mxu0 0.0
    %1856 = vmatprep.subr.mxu0 0.0
    %1857 = vmatpush1.msra.mxu0 0.0
    %1858 = vmatprep.mubr.f32.mxu0 0.0
    %v1859 = vand.u32 %v1791, 4294901760
    %v1860 = vsub.f32 %v1791, %v1859
    %v1861 = vand.u32 %v1860, 4294901760
    %v1862 = vsub.f32 %v1860, %v1861
    %v1863 = vand.u32 %v1862, 4294901760
    %1864 = vmatmul.mubr.f32.gmra.mrb[0].mxu0 %v1863
    %v1865 = vpop.f32.mrb[0].mxu0
    %v1866 = vadd.f32 0.0, %v1865
    %v1867 = vpop.f32.mrb[0].mxu0
    %1868 = vdwg.mxu0
    %1869 = vmatprep.subr.mxu0 0.0
    %v1870 = vand.u32 %v689, 4294901760
    %v1871 = vsub.f32 %v689, %v1870
    %v1872 = vand.u32 %v1871, 4294901760
    %v1873 = vsub.f32 %v1871, %v1872
    %v1874 = vand.u32 %v1873, 4294901760
    %1875 = vmatpush1.msra.mxu0 %v1874
    %1876 = vmatprep.subr.mxu0 0.0
    %1877 = vmatpush1.msra.mxu0 0.0
    %1878 = vmatprep.subr.mxu0 0.0
    %1879 = vmatpush1.msra.mxu0 0.0
    %1880 = vmatprep.subr.mxu0 0.0
    %1881 = vmatpush1.msra.mxu0 0.0
    %1882 = vmatprep.subr.mxu0 0.0
    %1883 = vmatpush1.msra.mxu0 0.0
    %1884 = vmatprep.subr.mxu0 0.0
    %1885 = vmatpush1.msra.mxu0 0.0
    %1886 = vmatprep.subr.mxu0 0.0
    %1887 = vmatpush1.msra.mxu0 0.0
    %1888 = vmatprep.subr.mxu0 0.0
    %1889 = vmatpush1.msra.mxu0 0.0
    %1890 = vmatprep.subr.mxu0 0.0
    %1891 = vmatpush1.msra.mxu0 0.0
    %1892 = vmatprep.subr.mxu0 0.0
    %1893 = vmatpush1.msra.mxu0 0.0
    %1894 = vmatprep.subr.mxu0 0.0
    %1895 = vmatpush1.msra.mxu0 0.0
    %1896 = vmatprep.subr.mxu0 0.0
    %1897 = vmatpush1.msra.mxu0 0.0
    %1898 = vmatprep.subr.mxu0 0.0
    %1899 = vmatpush1.msra.mxu0 0.0
    %1900 = vmatprep.subr.mxu0 0.0
    %1901 = vmatpush1.msra.mxu0 0.0
    %1902 = vmatprep.subr.mxu0 0.0
    %1903 = vmatpush1.msra.mxu0 0.0
    %1904 = vmatprep.subr.mxu0 0.0
    %1905 = vmatpush1.msra.mxu0 0.0
    %1906 = vmatprep.subr.mxu0 0.0
    %1907 = vmatpush1.msra.mxu0 0.0
    %1908 = vmatprep.subr.mxu0 0.0
    %1909 = vmatpush1.msra.mxu0 0.0
    %1910 = vmatprep.subr.mxu0 0.0
    %1911 = vmatpush1.msra.mxu0 0.0
    %1912 = vmatprep.subr.mxu0 0.0
    %1913 = vmatpush1.msra.mxu0 0.0
    %1914 = vmatprep.subr.mxu0 0.0
    %1915 = vmatpush1.msra.mxu0 0.0
    %1916 = vmatprep.subr.mxu0 0.0
    %1917 = vmatpush1.msra.mxu0 0.0
    %1918 = vmatprep.subr.mxu0 0.0
    %1919 = vmatpush1.msra.mxu0 0.0
    %1920 = vmatprep.subr.mxu0 0.0
    %1921 = vmatpush1.msra.mxu0 0.0
    %1922 = vmatprep.subr.mxu0 0.0
    %1923 = vmatpush1.msra.mxu0 0.0
    %1924 = vmatprep.subr.mxu0 0.0
    %1925 = vmatpush1.msra.mxu0 0.0
    %1926 = vmatprep.subr.mxu0 0.0
    %1927 = vmatpush1.msra.mxu0 0.0
    %1928 = vmatprep.subr.mxu0 0.0
    %1929 = vmatpush1.msra.mxu0 0.0
    %1930 = vmatprep.subr.mxu0 0.0
    %1931 = vmatpush1.msra.mxu0 0.0
    %1932 = vmatprep.subr.mxu0 0.0
    %1933 = vmatpush1.msra.mxu0 0.0
    %1934 = vmatprep.subr.mxu0 0.0
    %1935 = vmatpush1.msra.mxu0 0.0
    %1936 = vmatprep.subr.mxu0 0.0
    %1937 = vmatpush1.msra.mxu0 0.0
    %1938 = vmatprep.mubr.f32.mxu0 0.0
    %v1939 = vand.u32 %v1791, 4294901760
    %1940 = vmatmul.mubr.f32.gmra.mrb[0].mxu0 %v1939
    %v1941 = vpop.f32.mrb[0].mxu0
    %v1942 = vadd.f32 %v1866, %v1941
    %v1943 = vpop.f32.mrb[0].mxu0
    %1944 = vdwg.mxu0
    %1945 = vmatprep.subr.mxu0 0.0
    %v1946 = vand.u32 %v689, 4294901760
    %v1947 = vsub.f32 %v689, %v1946
    %1948 = vmatpush1.msra.mxu0 %v1947
    %1949 = vmatprep.subr.mxu0 0.0
    %1950 = vmatpush1.msra.mxu0 0.0
    %1951 = vmatprep.subr.mxu0 0.0
    %1952 = vmatpush1.msra.mxu0 0.0
    %1953 = vmatprep.subr.mxu0 0.0
    %1954 = vmatpush1.msra.mxu0 0.0
    %1955 = vmatprep.subr.mxu0 0.0
    %1956 = vmatpush1.msra.mxu0 0.0
    %1957 = vmatprep.subr.mxu0 0.0
    %1958 = vmatpush1.msra.mxu0 0.0
    %1959 = vmatprep.subr.mxu0 0.0
    %1960 = vmatpush1.msra.mxu0 0.0
    %1961 = vmatprep.subr.mxu0 0.0
    %1962 = vmatpush1.msra.mxu0 0.0
    %1963 = vmatprep.subr.mxu0 0.0
    %1964 = vmatpush1.msra.mxu0 0.0
    %1965 = vmatprep.subr.mxu0 0.0
    %1966 = vmatpush1.msra.mxu0 0.0
    %1967 = vmatprep.subr.mxu0 0.0
    %1968 = vmatpush1.msra.mxu0 0.0
    %1969 = vmatprep.subr.mxu0 0.0
    %1970 = vmatpush1.msra.mxu0 0.0
    %1971 = vmatprep.subr.mxu0 0.0
    %1972 = vmatpush1.msra.mxu0 0.0
    %1973 = vmatprep.subr.mxu0 0.0
    %1974 = vmatpush1.msra.mxu0 0.0
    %1975 = vmatprep.subr.mxu0 0.0
    %1976 = vmatpush1.msra.mxu0 0.0
    %1977 = vmatprep.subr.mxu0 0.0
    %1978 = vmatpush1.msra.mxu0 0.0
    %1979 = vmatprep.subr.mxu0 0.0
    %1980 = vmatpush1.msra.mxu0 0.0
    %1981 = vmatprep.subr.mxu0 0.0
    %1982 = vmatpush1.msra.mxu0 0.0
    %1983 = vmatprep.subr.mxu0 0.0
    %1984 = vmatpush1.msra.mxu0 0.0
    %1985 = vmatprep.subr.mxu0 0.0
    %1986 = vmatpush1.msra.mxu0 0.0
    %1987 = vmatprep.subr.mxu0 0.0
    %1988 = vmatpush1.msra.mxu0 0.0
    %1989 = vmatprep.subr.mxu0 0.0
    %1990 = vmatpush1.msra.mxu0 0.0
    %1991 = vmatprep.subr.mxu0 0.0
    %1992 = vmatpush1.msra.mxu0 0.0
    %1993 = vmatprep.subr.mxu0 0.0
    %1994 = vmatpush1.msra.mxu0 0.0
    %1995 = vmatprep.subr.mxu0 0.0
    %1996 = vmatpush1.msra.mxu0 0.0
    %1997 = vmatprep.subr.mxu0 0.0
    %1998 = vmatpush1.msra.mxu0 0.0
    %1999 = vmatprep.subr.mxu0 0.0
    %2000 = vmatpush1.msra.mxu0 0.0
    %2001 = vmatprep.subr.mxu0 0.0
    %2002 = vmatpush1.msra.mxu0 0.0
    %2003 = vmatprep.subr.mxu0 0.0
    %2004 = vmatpush1.msra.mxu0 0.0
    %2005 = vmatprep.subr.mxu0 0.0
    %2006 = vmatpush1.msra.mxu0 0.0
    %2007 = vmatprep.subr.mxu0 0.0
    %2008 = vmatpush1.msra.mxu0 0.0
    %2009 = vmatprep.subr.mxu0 0.0
    %2010 = vmatpush1.msra.mxu0 0.0
    %2011 = vmatprep.mubr.f32.mxu0 0.0
    %v2012 = vand.u32 %v1791, 4294901760
    %v2013 = vsub.f32 %v1791, %v2012
    %2014 = vmatmul.mubr.f32.gmra.mrb[0].mxu0 %v2013
    %v2015 = vpop.f32.mrb[0].mxu0
    %v2016 = vadd.f32 %v1942, %v2015
    %v2017 = vpop.f32.mrb[0].mxu0
    %2018 = vdwg.mxu0
    %2019 = vmatprep.subr.mxu0 0.0
    %v2020 = vand.u32 %v689, 4294901760
    %2021 = vmatpush1.msra.mxu0 %v2020
    %2022 = vmatprep.subr.mxu0 0.0
    %2023 = vmatpush1.msra.mxu0 0.0
    %2024 = vmatprep.subr.mxu0 0.0
    %2025 = vmatpush1.msra.mxu0 0.0
    %2026 = vmatprep.subr.mxu0 0.0
    %2027 = vmatpush1.msra.mxu0 0.0
    %2028 = vmatprep.subr.mxu0 0.0
    %2029 = vmatpush1.msra.mxu0 0.0
    %2030 = vmatprep.subr.mxu0 0.0
    %2031 = vmatpush1.msra.mxu0 0.0
    %2032 = vmatprep.subr.mxu0 0.0
    %2033 = vmatpush1.msra.mxu0 0.0
    %2034 = vmatprep.subr.mxu0 0.0
    %2035 = vmatpush1.msra.mxu0 0.0
    %2036 = vmatprep.subr.mxu0 0.0
    %2037 = vmatpush1.msra.mxu0 0.0
    %2038 = vmatprep.subr.mxu0 0.0
    %2039 = vmatpush1.msra.mxu0 0.0
    %2040 = vmatprep.subr.mxu0 0.0
    %2041 = vmatpush1.msra.mxu0 0.0
    %2042 = vmatprep.subr.mxu0 0.0
    %2043 = vmatpush1.msra.mxu0 0.0
    %2044 = vmatprep.subr.mxu0 0.0
    %2045 = vmatpush1.msra.mxu0 0.0
    %2046 = vmatprep.subr.mxu0 0.0
    %2047 = vmatpush1.msra.mxu0 0.0
    %2048 = vmatprep.subr.mxu0 0.0
    %2049 = vmatpush1.msra.mxu0 0.0
    %2050 = vmatprep.subr.mxu0 0.0
    %2051 = vmatpush1.msra.mxu0 0.0
    %2052 = vmatprep.subr.mxu0 0.0
    %2053 = vmatpush1.msra.mxu0 0.0
    %2054 = vmatprep.subr.mxu0 0.0
    %2055 = vmatpush1.msra.mxu0 0.0
    %2056 = vmatprep.subr.mxu0 0.0
    %2057 = vmatpush1.msra.mxu0 0.0
    %2058 = vmatprep.subr.mxu0 0.0
    %2059 = vmatpush1.msra.mxu0 0.0
    %2060 = vmatprep.subr.mxu0 0.0
    %2061 = vmatpush1.msra.mxu0 0.0
    %2062 = vmatprep.subr.mxu0 0.0
    %2063 = vmatpush1.msra.mxu0 0.0
    %2064 = vmatprep.subr.mxu0 0.0
    %2065 = vmatpush1.msra.mxu0 0.0
    %2066 = vmatprep.subr.mxu0 0.0
    %2067 = vmatpush1.msra.mxu0 0.0
    %2068 = vmatprep.subr.mxu0 0.0
    %2069 = vmatpush1.msra.mxu0 0.0
    %2070 = vmatprep.subr.mxu0 0.0
    %2071 = vmatpush1.msra.mxu0 0.0
    %2072 = vmatprep.subr.mxu0 0.0
    %2073 = vmatpush1.msra.mxu0 0.0
    %2074 = vmatprep.subr.mxu0 0.0
    %2075 = vmatpush1.msra.mxu0 0.0
    %2076 = vmatprep.subr.mxu0 0.0
    %2077 = vmatpush1.msra.mxu0 0.0
    %2078 = vmatprep.subr.mxu0 0.0
    %2079 = vmatpush1.msra.mxu0 0.0
    %2080 = vmatprep.subr.mxu0 0.0
    %2081 = vmatpush1.msra.mxu0 0.0
    %2082 = vmatprep.subr.mxu0 0.0
    %2083 = vmatpush1.msra.mxu0 0.0
    %2084 = vmatprep.mubr.f32.mxu0 0.0
    %v2085 = vand.u32 %v1791, 4294901760
    %v2086 = vsub.f32 %v1791, %v2085
    %v2087 = vand.u32 %v2086, 4294901760
    %2088 = vmatmul.mubr.f32.gmra.mrb[0].mxu0 %v2087
    %v2089 = vpop.f32.mrb[0].mxu0
    %v2090 = vadd.f32 %v2016, %v2089
    %v2091 = vpop.f32.mrb[0].mxu0
    %2092 = vdwg.mxu0
    %2093 = vmatprep.subr.mxu0 0.0
    %v2094 = vand.u32 %v689, 4294901760
    %v2095 = vsub.f32 %v689, %v2094
    %v2096 = vand.u32 %v2095, 4294901760
    %2097 = vmatpush1.msra.mxu0 %v2096
    %2098 = vmatprep.subr.mxu0 0.0
    %2099 = vmatpush1.msra.mxu0 0.0
    %2100 = vmatprep.subr.mxu0 0.0
    %2101 = vmatpush1.msra.mxu0 0.0
    %2102 = vmatprep.subr.mxu0 0.0
    %2103 = vmatpush1.msra.mxu0 0.0
    %2104 = vmatprep.subr.mxu0 0.0
    %2105 = vmatpush1.msra.mxu0 0.0
    %2106 = vmatprep.subr.mxu0 0.0
    %2107 = vmatpush1.msra.mxu0 0.0
    %2108 = vmatprep.subr.mxu0 0.0
    %2109 = vmatpush1.msra.mxu0 0.0
    %2110 = vmatprep.subr.mxu0 0.0
    %2111 = vmatpush1.msra.mxu0 0.0
    %2112 = vmatprep.subr.mxu0 0.0
    %2113 = vmatpush1.msra.mxu0 0.0
    %2114 = vmatprep.subr.mxu0 0.0
    %2115 = vmatpush1.msra.mxu0 0.0
    %2116 = vmatprep.subr.mxu0 0.0
    %2117 = vmatpush1.msra.mxu0 0.0
    %2118 = vmatprep.subr.mxu0 0.0
    %2119 = vmatpush1.msra.mxu0 0.0
    %2120 = vmatprep.subr.mxu0 0.0
    %2121 = vmatpush1.msra.mxu0 0.0
    %2122 = vmatprep.subr.mxu0 0.0
    %2123 = vmatpush1.msra.mxu0 0.0
    %2124 = vmatprep.subr.mxu0 0.0
    %2125 = vmatpush1.msra.mxu0 0.0
    %2126 = vmatprep.subr.mxu0 0.0
    %2127 = vmatpush1.msra.mxu0 0.0
    %2128 = vmatprep.subr.mxu0 0.0
    %2129 = vmatpush1.msra.mxu0 0.0
    %2130 = vmatprep.subr.mxu0 0.0
    %2131 = vmatpush1.msra.mxu0 0.0
    %2132 = vmatprep.subr.mxu0 0.0
    %2133 = vmatpush1.msra.mxu0 0.0
    %2134 = vmatprep.subr.mxu0 0.0
    %2135 = vmatpush1.msra.mxu0 0.0
    %2136 = vmatprep.subr.mxu0 0.0
    %2137 = vmatpush1.msra.mxu0 0.0
    %2138 = vmatprep.subr.mxu0 0.0
    %2139 = vmatpush1.msra.mxu0 0.0
    %2140 = vmatprep.subr.mxu0 0.0
    %2141 = vmatpush1.msra.mxu0 0.0
    %2142 = vmatprep.subr.mxu0 0.0
    %2143 = vmatpush1.msra.mxu0 0.0
    %2144 = vmatprep.subr.mxu0 0.0
    %2145 = vmatpush1.msra.mxu0 0.0
    %2146 = vmatprep.subr.mxu0 0.0
    %2147 = vmatpush1.msra.mxu0 0.0
    %2148 = vmatprep.subr.mxu0 0.0
    %2149 = vmatpush1.msra.mxu0 0.0
    %2150 = vmatprep.subr.mxu0 0.0
    %2151 = vmatpush1.msra.mxu0 0.0
    %2152 = vmatprep.subr.mxu0 0.0
    %2153 = vmatpush1.msra.mxu0 0.0
    %2154 = vmatprep.subr.mxu0 0.0
    %2155 = vmatpush1.msra.mxu0 0.0
    %2156 = vmatprep.subr.mxu0 0.0
    %2157 = vmatpush1.msra.mxu0 0.0
    %2158 = vmatprep.subr.mxu0 0.0
    %2159 = vmatpush1.msra.mxu0 0.0
    %2160 = vmatprep.mubr.f32.mxu0 0.0
    %v2161 = vand.u32 %v1791, 4294901760
    %2162 = vmatmul.mubr.f32.gmra.mrb[0].mxu0 %v2161
    %v2163 = vpop.f32.mrb[0].mxu0
    %v2164 = vadd.f32 %v2090, %v2163
    %v2165 = vpop.f32.mrb[0].mxu0
    %2166 = vdwg.mxu0
    %2167 = vmatprep.subr.mxu0 0.0
    %v2168 = vand.u32 %v689, 4294901760
    %2169 = vmatpush1.msra.mxu0 %v2168
    %2170 = vmatprep.subr.mxu0 0.0
    %2171 = vmatpush1.msra.mxu0 0.0
    %2172 = vmatprep.subr.mxu0 0.0
    %2173 = vmatpush1.msra.mxu0 0.0
    %2174 = vmatprep.subr.mxu0 0.0
    %2175 = vmatpush1.msra.mxu0 0.0
    %2176 = vmatprep.subr.mxu0 0.0
    %2177 = vmatpush1.msra.mxu0 0.0
    %2178 = vmatprep.subr.mxu0 0.0
    %2179 = vmatpush1.msra.mxu0 0.0
    %2180 = vmatprep.subr.mxu0 0.0
    %2181 = vmatpush1.msra.mxu0 0.0
    %2182 = vmatprep.subr.mxu0 0.0
    %2183 = vmatpush1.msra.mxu0 0.0
    %2184 = vmatprep.subr.mxu0 0.0
    %2185 = vmatpush1.msra.mxu0 0.0
    %2186 = vmatprep.subr.mxu0 0.0
    %2187 = vmatpush1.msra.mxu0 0.0
    %2188 = vmatprep.subr.mxu0 0.0
    %2189 = vmatpush1.msra.mxu0 0.0
    %2190 = vmatprep.subr.mxu0 0.0
    %2191 = vmatpush1.msra.mxu0 0.0
    %2192 = vmatprep.subr.mxu0 0.0
    %2193 = vmatpush1.msra.mxu0 0.0
    %2194 = vmatprep.subr.mxu0 0.0
    %2195 = vmatpush1.msra.mxu0 0.0
    %2196 = vmatprep.subr.mxu0 0.0
    %2197 = vmatpush1.msra.mxu0 0.0
    %2198 = vmatprep.subr.mxu0 0.0
    %2199 = vmatpush1.msra.mxu0 0.0
    %2200 = vmatprep.subr.mxu0 0.0
    %2201 = vmatpush1.msra.mxu0 0.0
    %2202 = vmatprep.subr.mxu0 0.0
    %2203 = vmatpush1.msra.mxu0 0.0
    %2204 = vmatprep.subr.mxu0 0.0
    %2205 = vmatpush1.msra.mxu0 0.0
    %2206 = vmatprep.subr.mxu0 0.0
    %2207 = vmatpush1.msra.mxu0 0.0
    %2208 = vmatprep.subr.mxu0 0.0
    %2209 = vmatpush1.msra.mxu0 0.0
    %2210 = vmatprep.subr.mxu0 0.0
    %2211 = vmatpush1.msra.mxu0 0.0
    %2212 = vmatprep.subr.mxu0 0.0
    %2213 = vmatpush1.msra.mxu0 0.0
    %2214 = vmatprep.subr.mxu0 0.0
    %2215 = vmatpush1.msra.mxu0 0.0
    %2216 = vmatprep.subr.mxu0 0.0
    %2217 = vmatpush1.msra.mxu0 0.0
    %2218 = vmatprep.subr.mxu0 0.0
    %2219 = vmatpush1.msra.mxu0 0.0
    %2220 = vmatprep.subr.mxu0 0.0
    %2221 = vmatpush1.msra.mxu0 0.0
    %2222 = vmatprep.subr.mxu0 0.0
    %2223 = vmatpush1.msra.mxu0 0.0
    %2224 = vmatprep.subr.mxu0 0.0
    %2225 = vmatpush1.msra.mxu0 0.0
    %2226 = vmatprep.subr.mxu0 0.0
    %2227 = vmatpush1.msra.mxu0 0.0
    %2228 = vmatprep.subr.mxu0 0.0
    %2229 = vmatpush1.msra.mxu0 0.0
    %2230 = vmatprep.subr.mxu0 0.0
    %2231 = vmatpush1.msra.mxu0 0.0
    %2232 = vmatprep.mubr.f32.mxu0 0.0
    %v2233 = vand.u32 %v1791, 4294901760
    %2234 = vmatmul.mubr.f32.gmra.mrb[0].mxu0 %v2233
    %v2235 = vpop.f32.mrb[0].mxu0
    %v2236 = vadd.f32 %v2164, %v2235
    %v2237 = vpop.f32.mrb[0].mxu0
    %2238 = vdwg.mxu0
    %v2239 = vmul.f32 %v1137, %v2236
    %v2241 = vlaneseq
    %v2242 = vshrl.u32 %v2241, 7
    %v2243 = vsub.s32 0, %v2242
    %v2244 = vrot.slane %v22, %v2243
    %v2246 = vmul.f32 %v2244, %v2239
    %v2248 = vlaneseq
    %v2249 = vshrl.u32 %v2248, 7
    %v2250 = vsub.s32 0, %v2249
    %v2251 = vrot.slane %v23, %v2250
    %v2253 = vadd.f32 %v2246, %v2251
    %2254 = vst [vmem:[#allocation2] sm:$0xf] %v2253
    // Predicated region
    $region22: #{tpu_custom_call.1} parent=1 // pred_check
      _
    $region23: #{tpu_custom_call.1} parent=1 // pred_check_branch
      %2256 = sbr.rel (0) target = $region25
    $region24: #{tpu_custom_call.1} parent=1 // pred_region
      %s2258 = ssub.s32 64, 64
      %2259 = vsyncadd [#allocation3], %s2258
      %s2261 = sshll.u32 [#allocation2], 4
      %s2262 = int_to_ptr.vmem [resolvable:$true] %s2261
      %2264 = dma.vmem_to_hbm [thread:$0]  %s2262, 64, %s5, [#allocation3]
    $region25: #{tpu_custom_call.1} parent=1 // pred_fallthru
      _
    // Predicated region
    $region26: #{tpu_custom_call.1} parent=1 // pred_check
      _
    $region27: #{tpu_custom_call.1} parent=1 // pred_check_branch
      %2266 = sbr.rel (0) target = $region29
    $region28: #{tpu_custom_call.1} parent=1 // pred_region
      %2267 = dma.done [#allocation3], 64
    $region29: #{tpu_custom_call.1} parent=1 // pred_fallthru
      _
    %2268 = vsyncpa [#allocation3], 1

</llo_original>
